<compile_context>
chip_gen: v5e
topology: v5e:2x2
jax: 0.10.0
libtpu: 0.0.40
codegen_flags: <defaults>
</compile_context>

<pallas_src>
import jax
import jax.numpy as jnp
from jax.experimental import pallas as pl
from jax.experimental.pallas import tpu as pltpu


def _round_up(x, m):
    return ((x + m - 1) // m) * m


def _choose_tm(b_pad):
    """Pick the batch tile: largest multiple of 128 (<= 1024) dividing b_pad,
    preferring multiples of 256, while keeping >= 2 grid steps when b_pad >= 256
    (so v7x megacore gets work on both TensorCores)."""
    units = b_pad // 128
    max_units = min(units, 8)                    # cap tm at 1024
    if units >= 2:
        max_units = min(max_units, units // 2)   # guarantee >= 2 grid steps
    max_units = max(max_units, 1)
    divs = [u for u in range(1, max_units + 1) if units % u == 0]
    even = [u for u in divs if u % 2 == 0]       # tm multiple of 256
    if even and 2 * even[-1] >= divs[-1]:
        return even[-1] * 128
    return divs[-1] * 128


def critic_kernel(x_ref, w1_ref, b1_ref, w2_ref, b2_ref,
                  w3_ref, b3_ref, w4_ref, b4_ref, o_ref):
    """One batch tile of the 4-layer critic MLP.

    x_ref        : (tm, D_pad) bf16  state tile (zero-padded features)
    w1..w3 refs  : bf16 [in, out]    MXU weights (whole, resident in VMEM)
    b1..b3 refs  : f32  (1, out)     biases (f32 epilogue)
    w4_ref       : (1, 256) f32      last-layer weight row (VPU/XLU path)
    b4_ref       : (1, 1)   f32
    o_ref        : (tm, 1)  f32      output column
    """
    x = x_ref[...]

    # fc1 + ReLU: bf16 MXU inputs, f32 accumulate, f32 bias/ReLU, bf16 store.
    h = jnp.dot(x, w1_ref[...], preferred_element_type=jnp.float32)
    h = jnp.maximum(h + b1_ref[...], 0.0).astype(jnp.bfloat16)      # (tm, 512)

    # fc2 + ReLU
    h = jnp.dot(h, w2_ref[...], preferred_element_type=jnp.float32)
    h = jnp.maximum(h + b2_ref[...], 0.0).astype(jnp.bfloat16)      # (tm, 512)

    # fc3 + ReLU (kept f32: feeds the VPU/XLU fc4 path, not the MXU).
    h = jnp.dot(h, w3_ref[...], preferred_element_type=jnp.float32)
    h = jnp.maximum(h + b3_ref[...], 0.0)                            # (tm, 256)

    # fc4 (256 -> 1): VPU multiply + XLU lane reduction in f32.
    q = jnp.sum(h * w4_ref[...], axis=-1, keepdims=True) + b4_ref[...]

    o_ref[...] = q.astype(o_ref.dtype)


def critic_forward(state, params):
    """state: [B, input_dims] float32 -> q: [B, 1] float32."""
    w1, b1, w2, b2, w3, b3, w4, b4 = params
    B, D = state.shape

    D_pad = _round_up(max(D, 1), 128)
    B_pad = _round_up(max(B, 1), 128)
    tm = _choose_tm(B_pad)
    grid = (B_pad // tm,)

    # Lane-dense, bf16 input DMA: pad batch/features with zeros, cast once.
    x = state
    if (B_pad, D_pad) != (B, D):
        x = jnp.pad(x, ((0, B_pad - B), (0, D_pad - D)))
    x = x.astype(jnp.bfloat16)

    # bf16 MXU weights; w1 gets zero rows for the padded features (exact).
    w1b = jnp.pad(w1, ((0, D_pad - D), (0, 0))).astype(jnp.bfloat16)
    w2b = w2.astype(jnp.bfloat16)
    w3b = w3.astype(jnp.bfloat16)
    b1r = jnp.reshape(b1, (1, -1)).astype(jnp.float32)
    b2r = jnp.reshape(b2, (1, -1)).astype(jnp.float32)
    b3r = jnp.reshape(b3, (1, -1)).astype(jnp.float32)
    w4row = jnp.reshape(w4, (1, -1)).astype(jnp.float32)    # (1, 256)
    b4s = jnp.reshape(b4, (1, 1)).astype(jnp.float32)       # (1, 1)

    def whole(arr):
        nd = arr.ndim
        return pl.BlockSpec(arr.shape, lambda i, _nd=nd: (0,) * _nd)

    out = pl.pallas_call(
        critic_kernel,
        out_shape=jax.ShapeDtypeStruct((B_pad, 1), jnp.float32),
        grid_spec=pltpu.PrefetchScalarGridSpec(
            num_scalar_prefetch=0,
            grid=grid,
            in_specs=[
                pl.BlockSpec((tm, D_pad), lambda i: (i, 0)),   # state tile
                whole(w1b), whole(b1r),
                whole(w2b), whole(b2r),
                whole(w3b), whole(b3r),
                whole(w4row), whole(b4s),
            ],
            out_specs=pl.BlockSpec((tm, 1), lambda i: (i, 0)),
        ),
        compiler_params=pltpu.CompilerParams(
            dimension_semantics=("parallel",),
        ),
    )(x, w1b, b1r, w2b, b2r, w3b, b3r, w4row, b4s)

    return out[:B, :]


def init_params(key, input_dims):
    """Deterministic PyTorch-Linear-style (uniform +/- 1/sqrt(fan_in)) init, f32."""
    dims = [(input_dims, 512), (512, 512), (512, 256), (256, 1)]
    params = []
    for (fan_in, fan_out) in dims:
        key, kw, kb = jax.random.split(key, 3)
        bound = 1.0 / jnp.sqrt(fan_in)
        w = jax.random.uniform(kw, (fan_in, fan_out), jnp.float32, -bound, bound)
        b = jax.random.uniform(kb, (1, fan_out), jnp.float32, -bound, bound)
        params += [w, b]
    return params


def critic_ref_f32(state, params):
    """Pure f32 reference (PyTorch semantics)."""
    w1, b1, w2, b2, w3, b3, w4, b4 = params
    h = jnp.maximum(state @ w1 + b1, 0.0)
    h = jnp.maximum(h @ w2 + b2, 0.0)
    h = jnp.maximum(h @ w3 + b3, 0.0)
    return h @ w4 + b4


def critic_ref_matched(state, params):
    """Reference matching the kernel's precision (bf16 MXU inputs / bf16
    inter-layer activations, f32 accumulation and epilogues)."""
    w1, b1, w2, b2, w3, b3, w4, b4 = params
    bf = jnp.bfloat16
    h = jnp.dot(state.astype(bf), w1.astype(bf),
                preferred_element_type=jnp.float32)
    h = jnp.maximum(h + b1, 0.0).astype(bf)
    h = jnp.dot(h, w2.astype(bf), preferred_element_type=jnp.float32)
    h = jnp.maximum(h + b2, 0.0).astype(bf)
    h = jnp.dot(h, w3.astype(bf), preferred_element_type=jnp.float32)
    h = jnp.maximum(h + b3, 0.0)
    return (jnp.sum(h * jnp.reshape(w4, (1, -1)), axis=-1, keepdims=True)
            + jnp.reshape(b4, (1, 1)))


if __name__ == "__main__":
    key = jax.random.PRNGKey(0)
    k_params, k_state = jax.random.split(key)

    input_dims = 32
    batch = 16

    params = init_params(k_params, input_dims)
    state = jax.random.normal(k_state, (batch, input_dims), jnp.float32)

    q = jax.block_until_ready(critic_forward(state, params))
    assert q.shape == (batch, 1), q.shape

    q_matched = critic_ref_matched(state, params)
    q_f32 = critic_ref_f32(state, params)
    assert jnp.allclose(q, q_matched, atol=5e-3, rtol=5e-3), \
        "mismatch vs precision-matched reference"
    assert jnp.allclose(q, q_f32, atol=5e-2, rtol=5e-2), \
        "mismatch vs f32 reference (beyond bf16 tolerance)"

    print("KERNEL_OK")
</pallas_src>

<mosaic_0001>
module attributes {stable_mosaic.version = 11 : i64} {
  func.func @critic_kernel(%arg0: i32, %arg1: memref<128x128xbf16, #tpu.memory_space<vmem>>, %arg2: memref<128x512xbf16, #tpu.memory_space<vmem>>, %arg3: memref<1x512xf32, #tpu.memory_space<vmem>>, %arg4: memref<512x512xbf16, #tpu.memory_space<vmem>>, %arg5: memref<1x512xf32, #tpu.memory_space<vmem>>, %arg6: memref<512x256xbf16, #tpu.memory_space<vmem>>, %arg7: memref<1x256xf32, #tpu.memory_space<vmem>>, %arg8: memref<1x256xf32, #tpu.memory_space<vmem>>, %arg9: memref<1x1xf32, #tpu.memory_space<vmem>>, %arg10: memref<128x1xf32, #tpu.memory_space<vmem>>) attributes {dimension_semantics = [#tpu.dimension_semantics<parallel>], iteration_bounds = array<i64: 1>, scalar_prefetch = 0 : i64, scratch_operands = 0 : i64, tpu.core_type = #tpu.core_type<tc>, window_params = [{transform_indices = @transform_0, window_bounds = array<i64: 128, 128>}, {pipeline_mode = #tpu.pipeline_mode<synchronous>, transform_indices = @transform_1, window_bounds = array<i64: 128, 512>}, {pipeline_mode = #tpu.pipeline_mode<synchronous>, transform_indices = @transform_2, window_bounds = array<i64: 1, 512>}, {pipeline_mode = #tpu.pipeline_mode<synchronous>, transform_indices = @transform_3, window_bounds = array<i64: 512, 512>}, {pipeline_mode = #tpu.pipeline_mode<synchronous>, transform_indices = @transform_4, window_bounds = array<i64: 1, 512>}, {pipeline_mode = #tpu.pipeline_mode<synchronous>, transform_indices = @transform_5, window_bounds = array<i64: 512, 256>}, {pipeline_mode = #tpu.pipeline_mode<synchronous>, transform_indices = @transform_6, window_bounds = array<i64: 1, 256>}, {pipeline_mode = #tpu.pipeline_mode<synchronous>, transform_indices = @transform_7, window_bounds = array<i64: 1, 256>}, {pipeline_mode = #tpu.pipeline_mode<synchronous>, transform_indices = @transform_8, window_bounds = array<i64: 1, 1>}, {transform_indices = @transform_9, window_bounds = array<i64: 128, 1>}]} {
    %c0 = arith.constant 0 : index
    %c0_0 = arith.constant 0 : index
    %0 = vector.load %arg1[%c0, %c0_0] : memref<128x128xbf16, #tpu.memory_space<vmem>>, vector<128x128xbf16>
    %c0_1 = arith.constant 0 : index
    %c0_2 = arith.constant 0 : index
    %1 = vector.load %arg2[%c0_1, %c0_2] : memref<128x512xbf16, #tpu.memory_space<vmem>>, vector<128x512xbf16>
    %cst = arith.constant dense<0.000000e+00> : vector<128x512xf32>
    %2 = tpu.matmul %0, %1, %cst {dimension_numbers = #tpu.dot_dimension_numbers<[1], [0], [0], [1], [0, 0, 1, 1], [], []>} : vector<128x128xbf16>, vector<128x512xbf16>, vector<128x512xf32> -> vector<128x512xf32>
    %c0_3 = arith.constant 0 : index
    %c0_4 = arith.constant 0 : index
    %3 = vector.load %arg3[%c0_3, %c0_4] : memref<1x512xf32, #tpu.memory_space<vmem>>, vector<1x512xf32>
    %4 = vector.broadcast %3 : vector<1x512xf32> to vector<128x512xf32>
    %5 = arith.addf %2, %4 : vector<128x512xf32>
    %cst_5 = arith.constant 0.000000e+00 : f32
    %6 = vector.broadcast %cst_5 : f32 to vector<128x512xf32>
    %7 = arith.maximumf %5, %6 : vector<128x512xf32>
    %8 = arith.truncf %7 : vector<128x512xf32> to vector<128x512xbf16>
    %c0_6 = arith.constant 0 : index
    %c0_7 = arith.constant 0 : index
    %9 = vector.load %arg4[%c0_6, %c0_7] : memref<512x512xbf16, #tpu.memory_space<vmem>>, vector<512x512xbf16>
    %cst_8 = arith.constant dense<0.000000e+00> : vector<128x512xf32>
    %10 = tpu.matmul %8, %9, %cst_8 {dimension_numbers = #tpu.dot_dimension_numbers<[1], [0], [0], [1], [0, 0, 1, 1], [], []>} : vector<128x512xbf16>, vector<512x512xbf16>, vector<128x512xf32> -> vector<128x512xf32>
    %c0_9 = arith.constant 0 : index
    %c0_10 = arith.constant 0 : index
    %11 = vector.load %arg5[%c0_9, %c0_10] : memref<1x512xf32, #tpu.memory_space<vmem>>, vector<1x512xf32>
    %12 = vector.broadcast %11 : vector<1x512xf32> to vector<128x512xf32>
    %13 = arith.addf %10, %12 : vector<128x512xf32>
    %cst_11 = arith.constant 0.000000e+00 : f32
    %14 = vector.broadcast %cst_11 : f32 to vector<128x512xf32>
    %15 = arith.maximumf %13, %14 : vector<128x512xf32>
    %16 = arith.truncf %15 : vector<128x512xf32> to vector<128x512xbf16>
    %c0_12 = arith.constant 0 : index
    %c0_13 = arith.constant 0 : index
    %17 = vector.load %arg6[%c0_12, %c0_13] : memref<512x256xbf16, #tpu.memory_space<vmem>>, vector<512x256xbf16>
    %cst_14 = arith.constant dense<0.000000e+00> : vector<128x256xf32>
    %18 = tpu.matmul %16, %17, %cst_14 {dimension_numbers = #tpu.dot_dimension_numbers<[1], [0], [0], [1], [0, 0, 1, 1], [], []>} : vector<128x512xbf16>, vector<512x256xbf16>, vector<128x256xf32> -> vector<128x256xf32>
    %c0_15 = arith.constant 0 : index
    %c0_16 = arith.constant 0 : index
    %19 = vector.load %arg7[%c0_15, %c0_16] : memref<1x256xf32, #tpu.memory_space<vmem>>, vector<1x256xf32>
    %20 = vector.broadcast %19 : vector<1x256xf32> to vector<128x256xf32>
    %21 = arith.addf %18, %20 : vector<128x256xf32>
    %cst_17 = arith.constant 0.000000e+00 : f32
    %22 = vector.broadcast %cst_17 : f32 to vector<128x256xf32>
    %23 = arith.maximumf %21, %22 : vector<128x256xf32>
    %c0_18 = arith.constant 0 : index
    %c0_19 = arith.constant 0 : index
    %24 = vector.load %arg8[%c0_18, %c0_19] : memref<1x256xf32, #tpu.memory_space<vmem>>, vector<1x256xf32>
    %25 = vector.broadcast %24 : vector<1x256xf32> to vector<128x256xf32>
    %26 = arith.mulf %23, %25 : vector<128x256xf32>
    %cst_20 = arith.constant dense<0.000000e+00> : vector<128xf32>
    %27 = vector.multi_reduction <add>, %26, %cst_20 [1] : vector<128x256xf32> to vector<128xf32>
    %28 = vector.shape_cast %27 : vector<128xf32> to vector<128x1xf32>
    %c0_21 = arith.constant 0 : index
    %c0_22 = arith.constant 0 : index
    %29 = vector.load %arg9[%c0_21, %c0_22] : memref<1x1xf32, #tpu.memory_space<vmem>>, vector<1x1xf32>
    %30 = vector.broadcast %29 : vector<1x1xf32> to vector<128x1xf32>
    %31 = arith.addf %28, %30 : vector<128x1xf32>
    %c0_23 = arith.constant 0 : index
    %c0_24 = arith.constant 0 : index
    %32 = vector.load %arg10[%c0_23, %c0_24] : memref<128x1xf32, #tpu.memory_space<vmem>>, vector<128x1xf32>
    tpu.vector_store %arg10[%c0_23, %c0_24], %31 {strides = array<i32>} : memref<128x1xf32, #tpu.memory_space<vmem>>, vector<128x1xf32>,
    return
  }
  func.func @transform_0(%arg0: i32) -> (i32, i32) {
    %c0_i32 = arith.constant 0 : i32
    %c0_i32_0 = arith.constant 0 : i32
    return %arg0, %c0_i32 : i32, i32
  }
  func.func @transform_1(%arg0: i32) -> (i32, i32) {
    %c0_i32 = arith.constant 0 : i32
    %c0_i32_0 = arith.constant 0 : i32
    %c0_i32_1 = arith.constant 0 : i32
    return %c0_i32, %c0_i32_0 : i32, i32
  }
  func.func @transform_2(%arg0: i32) -> (i32, i32) {
    %c0_i32 = arith.constant 0 : i32
    %c0_i32_0 = arith.constant 0 : i32
    %c0_i32_1 = arith.constant 0 : i32
    return %c0_i32, %c0_i32_0 : i32, i32
  }
  func.func @transform_3(%arg0: i32) -> (i32, i32) {
    %c0_i32 = arith.constant 0 : i32
    %c0_i32_0 = arith.constant 0 : i32
    %c0_i32_1 = arith.constant 0 : i32
    return %c0_i32, %c0_i32_0 : i32, i32
  }
  func.func @transform_4(%arg0: i32) -> (i32, i32) {
    %c0_i32 = arith.constant 0 : i32
    %c0_i32_0 = arith.constant 0 : i32
    %c0_i32_1 = arith.constant 0 : i32
    return %c0_i32, %c0_i32_0 : i32, i32
  }
  func.func @transform_5(%arg0: i32) -> (i32, i32) {
    %c0_i32 = arith.constant 0 : i32
    %c0_i32_0 = arith.constant 0 : i32
    %c0_i32_1 = arith.constant 0 : i32
    return %c0_i32, %c0_i32_0 : i32, i32
  }
  func.func @transform_6(%arg0: i32) -> (i32, i32) {
    %c0_i32 = arith.constant 0 : i32
    %c0_i32_0 = arith.constant 0 : i32
    %c0_i32_1 = arith.constant 0 : i32
    return %c0_i32, %c0_i32_0 : i32, i32
  }
  func.func @transform_7(%arg0: i32) -> (i32, i32) {
    %c0_i32 = arith.constant 0 : i32
    %c0_i32_0 = arith.constant 0 : i32
    %c0_i32_1 = arith.constant 0 : i32
    return %c0_i32, %c0_i32_0 : i32, i32
  }
  func.func @transform_8(%arg0: i32) -> (i32, i32) {
    %c0_i32 = arith.constant 0 : i32
    %c0_i32_0 = arith.constant 0 : i32
    %c0_i32_1 = arith.constant 0 : i32
    return %c0_i32, %c0_i32_0 : i32, i32
  }
  func.func @transform_9(%arg0: i32) -> (i32, i32) {
    %c0_i32 = arith.constant 0 : i32
    %c0_i32_0 = arith.constant 0 : i32
    return %arg0, %c0_i32 : i32, i32
  }
}

</mosaic_0001>

<llo_original>
// kernel: tpu_custom_call.1
$region0: #{tpu_custom_call.1}
  #allocation0 [shape = 'u32[]', space=smem, size = 0x4, offset = 0x4, fixed_abs, tag = 'smem constant byte address 0x4 - core index']
  #allocation1 [shape = 'u32[72,128]{1,0:T(1,128)}', space=vmem, size = 0x9000, scoped, tag = 'internal scratch']
  #allocation2 [shape = 'f32[1,1]{1,0:T(1,128)S(1)}', space=vmem, size = 0x200, scoped, tag = 'scoped memory for tpu_custom_call.1']
  %s0 = inlined_call_operand.hbm [shape: bf16[128,128], index: 0, kind: input, shape index: {}]
  %s1 = inlined_call_operand.hbm [shape: bf16[128,512], index: 1, kind: input, shape index: {}]
  %s2 = inlined_call_operand.hbm [shape: f32[1,512], index: 2, kind: input, shape index: {}]
  %s3 = inlined_call_operand.hbm [shape: bf16[512,512], index: 3, kind: input, shape index: {}]
  %s4 = inlined_call_operand.vmem [shape: f32[1,512], index: 4, kind: input, shape index: {}]
  %s5 = inlined_call_operand.hbm [shape: bf16[512,256], index: 5, kind: input, shape index: {}]
  %s6 = inlined_call_operand.vmem [shape: f32[1,256], index: 6, kind: input, shape index: {}]
  %s7 = inlined_call_operand.vmem [shape: f32[1,256], index: 7, kind: input, shape index: {}]
  %s8 = inlined_call_operand.<no memory space> [shape: f32[1,1], index: 8, kind: input, shape index: {}]
  %s9 = inlined_call_operand.vmem [shape: f32[128,1], index: 9, kind: output, shape index: {}]
  %s10 = sld [smem:[#allocation0]]
  $region66: #{tpu_custom_call.1} parent=0
    _
  %s12 = ssub.s32 1, %s10
  %s13 = scalar_select 0, %s12, %s10
  %v14 = vstv %s8
  %15 = vst [vmem:[#allocation2] sm:$0x1] %v14
  $region1: #{tpu_custom_call.1} parent=0
    #allocation3 [shape = 'u8[32768]{0}', space=vmem, size = 0x8000, scoped, tag = 'input window, operand 0, single buffered']
    #allocation4 [shape = 's32[1]{0}', space=sflag, size = 0x4, scoped, tag = 'scoped memory for tpu_custom_call.1']
    #allocation5 [shape = 'u8[131072]{0}', space=vmem, size = 0x20000, scoped, tag = 'input window, operand 1, single buffered']
    #allocation6 [shape = 's32[1]{0}', space=sflag, size = 0x4, scoped, tag = 'scoped memory for tpu_custom_call.1']
    #allocation7 [shape = 'u8[2048]{0}', space=vmem, size = 0x800, scoped, tag = 'input window, operand 2, single buffered']
    #allocation8 [shape = 'u8[524288]{0}', space=vmem, size = 0x80000, scoped, tag = 'input window, operand 3, single buffered']
    #allocation9 [shape = 's32[1]{0}', space=sflag, size = 0x4, scoped, tag = 'scoped memory for tpu_custom_call.1']
    #allocation10 [shape = 'u8[262144]{0}', space=vmem, size = 0x40000, scoped, tag = 'input window, operand 5, single buffered']
    %16 = vsyncpa [#allocation4], 0
    %17 = vsyncpa [#allocation6], 0
    %18 = vsyncpa [#allocation9], 0
    // Predicated region
    $region2: #{tpu_custom_call.1} parent=1 // pred_check
      _
    $region3: #{tpu_custom_call.1} parent=1 // pred_check_branch
      %20 = sbr.rel (0) target = $region5
    $region4: #{tpu_custom_call.1} parent=1 // pred_region
      %22 = vsyncadd [#allocation4], 0
      %s23 = sshll.u32 %s0, 4
      %s24 = int_to_ptr.hbm [resolvable:$true] %s23
      %s25 = sshll.u32 [#allocation3], 4
      %s26 = int_to_ptr.vmem [resolvable:$true] %s25
      %31 = dma.hbm_to_vmem [thread:$0]  %s24, 1024, %s26, [#allocation4], 64, 64, 4
    $region5: #{tpu_custom_call.1} parent=1 // pred_fallthru
      _
    // Predicated region
    $region6: #{tpu_custom_call.1} parent=1 // pred_check
      _
    $region7: #{tpu_custom_call.1} parent=1 // pred_check_branch
      %33 = sbr.rel (0) target = $region9
    $region8: #{tpu_custom_call.1} parent=1 // pred_region
      %35 = vsyncadd [#allocation6], 0
      %s36 = sshll.u32 %s1, 4
      %s37 = int_to_ptr.hbm [resolvable:$true] %s36
      %s38 = sshll.u32 [#allocation5], 4
      %s39 = int_to_ptr.vmem [resolvable:$true] %s38
      %44 = dma.hbm_to_vmem [thread:$0]  %s37, 4096, %s39, [#allocation6], 256, 256, 16
    $region9: #{tpu_custom_call.1} parent=1 // pred_fallthru
      _
    // Predicated region
    $region10: #{tpu_custom_call.1} parent=1 // pred_check
      _
    $region11: #{tpu_custom_call.1} parent=1 // pred_check_branch
      %46 = sbr.rel (0) target = $region13
    $region12: #{tpu_custom_call.1} parent=1 // pred_region
      %48 = vsyncadd [#allocation6], 0
      %s50 = sshll.u32 %s2, 4
      %s51 = int_to_ptr.hbm [resolvable:$true] %s50
      %s52 = sshll.u32 [#allocation7], 4
      %s53 = int_to_ptr.vmem [resolvable:$true] %s52
      %55 = dma.hbm_to_vmem [thread:$0]  %s51, 64, %s53, [#allocation6]
    $region13: #{tpu_custom_call.1} parent=1 // pred_fallthru
      _
    // Predicated region
    $region14: #{tpu_custom_call.1} parent=1 // pred_check
      _
    $region15: #{tpu_custom_call.1} parent=1 // pred_check_branch
      %57 = sbr.rel (0) target = $region17
    $region16: #{tpu_custom_call.1} parent=1 // pred_region
      %59 = vsyncadd [#allocation9], 0
      %s60 = sshll.u32 %s3, 4
      %s61 = int_to_ptr.hbm [resolvable:$true] %s60
      %s62 = sshll.u32 [#allocation8], 4
      %s63 = int_to_ptr.vmem [resolvable:$true] %s62
      %68 = dma.hbm_to_vmem [thread:$0]  %s61, 16384, %s63, [#allocation9], 256, 256, 16
    $region17: #{tpu_custom_call.1} parent=1 // pred_fallthru
      _
    // Predicated region
    $region18: #{tpu_custom_call.1} parent=1 // pred_check
      _
    $region19: #{tpu_custom_call.1} parent=1 // pred_check_branch
      %70 = sbr.rel (0) target = $region21
    $region20: #{tpu_custom_call.1} parent=1 // pred_region
      _
    $region21: #{tpu_custom_call.1} parent=1 // pred_fallthru
      _
    // Predicated region
    $region22: #{tpu_custom_call.1} parent=1 // pred_check
      _
    $region23: #{tpu_custom_call.1} parent=1 // pred_check_branch
      %72 = sbr.rel (0) target = $region25
    $region24: #{tpu_custom_call.1} parent=1 // pred_region
      %74 = vsyncadd [#allocation9], 0
      %s75 = sshll.u32 %s5, 4
      %s76 = int_to_ptr.hbm [resolvable:$true] %s75
      %s77 = sshll.u32 [#allocation10], 4
      %s78 = int_to_ptr.vmem [resolvable:$true] %s77
      %83 = dma.hbm_to_vmem [thread:$0]  %s76, 8192, %s78, [#allocation9], 128, 128, 8
    $region25: #{tpu_custom_call.1} parent=1 // pred_fallthru
      _
    // Predicated region
    $region26: #{tpu_custom_call.1} parent=1 // pred_check
      _
    $region27: #{tpu_custom_call.1} parent=1 // pred_check_branch
      %85 = sbr.rel (0) target = $region29
    $region28: #{tpu_custom_call.1} parent=1 // pred_region
      _
    $region29: #{tpu_custom_call.1} parent=1 // pred_fallthru
      _
    // Predicated region
    $region30: #{tpu_custom_call.1} parent=1 // pred_check
      _
    $region31: #{tpu_custom_call.1} parent=1 // pred_check_branch
      %87 = sbr.rel (0) target = $region33
    $region32: #{tpu_custom_call.1} parent=1 // pred_region
      _
    $region33: #{tpu_custom_call.1} parent=1 // pred_fallthru
      _
    // Predicated region
    $region34: #{tpu_custom_call.1} parent=1 // pred_check
      _
    $region35: #{tpu_custom_call.1} parent=1 // pred_check_branch
      %89 = sbr.rel (0) target = $region37
    $region36: #{tpu_custom_call.1} parent=1 // pred_region
      _
    $region37: #{tpu_custom_call.1} parent=1 // pred_fallthru
      _
    // Predicated region
    $region38: #{tpu_custom_call.1} parent=1 // pred_check
      _
    $region39: #{tpu_custom_call.1} parent=1 // pred_check_branch
      %91 = sbr.rel (0) target = $region41
    $region40: #{tpu_custom_call.1} parent=1 // pred_region
      %93 = dma.done [#allocation4], 1024
    $region41: #{tpu_custom_call.1} parent=1 // pred_fallthru
      _
    // Predicated region
    $region42: #{tpu_custom_call.1} parent=1 // pred_check
      _
    $region43: #{tpu_custom_call.1} parent=1 // pred_check_branch
      %95 = sbr.rel (0) target = $region45
    $region44: #{tpu_custom_call.1} parent=1 // pred_region
      %97 = dma.done [#allocation6], 4096
    $region45: #{tpu_custom_call.1} parent=1 // pred_fallthru
      _
    // Predicated region
    $region46: #{tpu_custom_call.1} parent=1 // pred_check
      _
    $region47: #{tpu_custom_call.1} parent=1 // pred_check_branch
      %99 = sbr.rel (0) target = $region49
    $region48: #{tpu_custom_call.1} parent=1 // pred_region
      %101 = dma.done [#allocation6], 64
    $region49: #{tpu_custom_call.1} parent=1 // pred_fallthru
      _
    // Predicated region
    $region50: #{tpu_custom_call.1} parent=1 // pred_check
      _
    $region51: #{tpu_custom_call.1} parent=1 // pred_check_branch
      %103 = sbr.rel (0) target = $region53
    $region52: #{tpu_custom_call.1} parent=1 // pred_region
      %105 = dma.done [#allocation9], 16384
    $region53: #{tpu_custom_call.1} parent=1 // pred_fallthru
      _
    // Predicated region
    $region54: #{tpu_custom_call.1} parent=1 // pred_check
      _
    $region55: #{tpu_custom_call.1} parent=1 // pred_check_branch
      %107 = sbr.rel (0) target = $region57
    $region56: #{tpu_custom_call.1} parent=1 // pred_region
      %109 = dma.done [#allocation9], 8192
    $region57: #{tpu_custom_call.1} parent=1 // pred_fallthru
      _
    %v110 = vld [vmem:[#allocation3] sm:$0xf]
    %v111 = vld [vmem:[#allocation3 + $0x4] sm:$0xf]
    %v112 = vld [vmem:[#allocation3 + $0x8] sm:$0xf]
    %v113 = vld [vmem:[#allocation3 + $0xc] sm:$0xf]
    %v114 = vld [vmem:[#allocation3 + $0x10] sm:$0xf]
    %v115 = vld [vmem:[#allocation3 + $0x14] sm:$0xf]
    %v116 = vld [vmem:[#allocation3 + $0x18] sm:$0xf]
    %v117 = vld [vmem:[#allocation3 + $0x1c] sm:$0xf]
    %v118 = vld [vmem:[#allocation3 + $0x20] sm:$0xf]
    %v119 = vld [vmem:[#allocation3 + $0x24] sm:$0xf]
    %v120 = vld [vmem:[#allocation3 + $0x28] sm:$0xf]
    %v121 = vld [vmem:[#allocation3 + $0x2c] sm:$0xf]
    %v122 = vld [vmem:[#allocation3 + $0x30] sm:$0xf]
    %v123 = vld [vmem:[#allocation3 + $0x34] sm:$0xf]
    %v124 = vld [vmem:[#allocation3 + $0x38] sm:$0xf]
    %v125 = vld [vmem:[#allocation3 + $0x3c] sm:$0xf]
    %v126 = vld [vmem:[#allocation5] sm:$0xff]
    %v127 = vld [vmem:[#allocation5 + $0x8] sm:$0xff]
    %v128 = vld [vmem:[#allocation5 + $0x10] sm:$0xff]
    %v129 = vld [vmem:[#allocation5 + $0x18] sm:$0xff]
    %v130 = vld [vmem:[#allocation5 + $0x20] sm:$0xff]
    %v131 = vld [vmem:[#allocation5 + $0x28] sm:$0xff]
    %v132 = vld [vmem:[#allocation5 + $0x30] sm:$0xff]
    %v133 = vld [vmem:[#allocation5 + $0x38] sm:$0xff]
    %v134 = vld [vmem:[#allocation5 + $0x40] sm:$0xff]
    %v135 = vld [vmem:[#allocation5 + $0x48] sm:$0xff]
    %v136 = vld [vmem:[#allocation5 + $0x50] sm:$0xff]
    %v137 = vld [vmem:[#allocation5 + $0x58] sm:$0xff]
    %v138 = vld [vmem:[#allocation5 + $0x60] sm:$0xff]
    %v139 = vld [vmem:[#allocation5 + $0x68] sm:$0xff]
    %v140 = vld [vmem:[#allocation5 + $0x70] sm:$0xff]
    %v141 = vld [vmem:[#allocation5 + $0x78] sm:$0xff]
    %v142 = vld [vmem:[#allocation5 + $0x80] sm:$0xff]
    %v143 = vld [vmem:[#allocation5 + $0x88] sm:$0xff]
    %v144 = vld [vmem:[#allocation5 + $0x90] sm:$0xff]
    %v145 = vld [vmem:[#allocation5 + $0x98] sm:$0xff]
    %v146 = vld [vmem:[#allocation5 + $0xa0] sm:$0xff]
    %v147 = vld [vmem:[#allocation5 + $0xa8] sm:$0xff]
    %v148 = vld [vmem:[#allocation5 + $0xb0] sm:$0xff]
    %v149 = vld [vmem:[#allocation5 + $0xb8] sm:$0xff]
    %v150 = vld [vmem:[#allocation5 + $0xc0] sm:$0xff]
    %v151 = vld [vmem:[#allocation5 + $0xc8] sm:$0xff]
    %v152 = vld [vmem:[#allocation5 + $0xd0] sm:$0xff]
    %v153 = vld [vmem:[#allocation5 + $0xd8] sm:$0xff]
    %v154 = vld [vmem:[#allocation5 + $0xe0] sm:$0xff]
    %v155 = vld [vmem:[#allocation5 + $0xe8] sm:$0xff]
    %v156 = vld [vmem:[#allocation5 + $0xf0] sm:$0xff]
    %v157 = vld [vmem:[#allocation5 + $0xf8] sm:$0xff]
    %v158 = vld [vmem:[#allocation7] sm:$0xf]
    %v160 = vperm.slane %v158, 0
    %v161 = vperm.slane %v158, 1
    %v162 = vperm.slane %v158, 2
    %v163 = vperm.slane %v158, 3
    %v184 = vunpack.c.l.b16 %v110
    %v185 = vunpack.c.l.b16 %v111
    %v186 = vunpack.c.l.b16 %v112
    %v187 = vunpack.c.l.b16 %v113
    %v188 = vunpack.c.l.b16 %v114
    %v189 = vunpack.c.l.b16 %v115
    %v190 = vunpack.c.l.b16 %v116
    %v191 = vunpack.c.l.b16 %v117
    %v192 = vunpack.c.l.b16 %v118
    %v193 = vunpack.c.l.b16 %v119
    %v194 = vunpack.c.l.b16 %v120
    %v195 = vunpack.c.l.b16 %v121
    %v196 = vunpack.c.l.b16 %v122
    %v197 = vunpack.c.l.b16 %v123
    %v198 = vunpack.c.l.b16 %v124
    %v199 = vunpack.c.l.b16 %v125
    %v200 = vpack.c.b16 %v185, %v184
    %v201 = vpack.c.b16 %v187, %v186
    %v202 = vpack.c.b16 %v189, %v188
    %v203 = vpack.c.b16 %v191, %v190
    %v204 = vpack.c.b16 %v193, %v192
    %v205 = vpack.c.b16 %v195, %v194
    %v206 = vpack.c.b16 %v197, %v196
    %v207 = vpack.c.b16 %v199, %v198
    %v248 = vunpack.c.l.b16 %v126
    %v249 = vunpack.c.h.b16 %v126
    %v250 = vunpack.c.l.b16 %v127
    %v251 = vunpack.c.h.b16 %v127
    %v252 = vunpack.c.l.b16 %v128
    %v253 = vunpack.c.h.b16 %v128
    %v254 = vunpack.c.l.b16 %v129
    %v255 = vunpack.c.h.b16 %v129
    %v256 = vunpack.c.l.b16 %v130
    %v257 = vunpack.c.h.b16 %v130
    %v258 = vunpack.c.l.b16 %v131
    %v259 = vunpack.c.h.b16 %v131
    %v260 = vunpack.c.l.b16 %v132
    %v261 = vunpack.c.h.b16 %v132
    %v262 = vunpack.c.l.b16 %v133
    %v263 = vunpack.c.h.b16 %v133
    %v264 = vunpack.c.l.b16 %v134
    %v265 = vunpack.c.h.b16 %v134
    %v266 = vunpack.c.l.b16 %v135
    %v267 = vunpack.c.h.b16 %v135
    %v268 = vunpack.c.l.b16 %v136
    %v269 = vunpack.c.h.b16 %v136
    %v270 = vunpack.c.l.b16 %v137
    %v271 = vunpack.c.h.b16 %v137
    %v272 = vunpack.c.l.b16 %v138
    %v273 = vunpack.c.h.b16 %v138
    %v274 = vunpack.c.l.b16 %v139
    %v275 = vunpack.c.h.b16 %v139
    %v276 = vunpack.c.l.b16 %v140
    %v277 = vunpack.c.h.b16 %v140
    %v278 = vunpack.c.l.b16 %v141
    %v279 = vunpack.c.h.b16 %v141
    %v280 = vunpack.c.l.b16 %v142
    %v281 = vunpack.c.h.b16 %v142
    %v282 = vunpack.c.l.b16 %v143
    %v283 = vunpack.c.h.b16 %v143
    %v284 = vunpack.c.l.b16 %v144
    %v285 = vunpack.c.h.b16 %v144
    %v286 = vunpack.c.l.b16 %v145
    %v287 = vunpack.c.h.b16 %v145
    %v288 = vunpack.c.l.b16 %v146
    %v289 = vunpack.c.h.b16 %v146
    %v290 = vunpack.c.l.b16 %v147
    %v291 = vunpack.c.h.b16 %v147
    %v292 = vunpack.c.l.b16 %v148
    %v293 = vunpack.c.h.b16 %v148
    %v294 = vunpack.c.l.b16 %v149
    %v295 = vunpack.c.h.b16 %v149
    %v296 = vunpack.c.l.b16 %v150
    %v297 = vunpack.c.h.b16 %v150
    %v298 = vunpack.c.l.b16 %v151
    %v299 = vunpack.c.h.b16 %v151
    %v300 = vunpack.c.l.b16 %v152
    %v301 = vunpack.c.h.b16 %v152
    %v302 = vunpack.c.l.b16 %v153
    %v303 = vunpack.c.h.b16 %v153
    %v304 = vunpack.c.l.b16 %v154
    %v305 = vunpack.c.h.b16 %v154
    %v306 = vunpack.c.l.b16 %v155
    %v307 = vunpack.c.h.b16 %v155
    %v308 = vunpack.c.l.b16 %v156
    %v309 = vunpack.c.h.b16 %v156
    %v310 = vunpack.c.l.b16 %v157
    %v311 = vunpack.c.h.b16 %v157
    %v312 = vpack.c.b16 %v252, %v248
    %v313 = vpack.c.b16 %v253, %v249
    %v314 = vpack.c.b16 %v254, %v250
    %v315 = vpack.c.b16 %v255, %v251
    %v316 = vpack.c.b16 %v260, %v256
    %v317 = vpack.c.b16 %v261, %v257
    %v318 = vpack.c.b16 %v262, %v258
    %v319 = vpack.c.b16 %v263, %v259
    %v320 = vpack.c.b16 %v268, %v264
    %v321 = vpack.c.b16 %v269, %v265
    %v322 = vpack.c.b16 %v270, %v266
    %v323 = vpack.c.b16 %v271, %v267
    %v324 = vpack.c.b16 %v276, %v272
    %v325 = vpack.c.b16 %v277, %v273
    %v326 = vpack.c.b16 %v278, %v274
    %v327 = vpack.c.b16 %v279, %v275
    %v328 = vpack.c.b16 %v284, %v280
    %v329 = vpack.c.b16 %v285, %v281
    %v330 = vpack.c.b16 %v286, %v282
    %v331 = vpack.c.b16 %v287, %v283
    %v332 = vpack.c.b16 %v292, %v288
    %v333 = vpack.c.b16 %v293, %v289
    %v334 = vpack.c.b16 %v294, %v290
    %v335 = vpack.c.b16 %v295, %v291
    %v336 = vpack.c.b16 %v300, %v296
    %v337 = vpack.c.b16 %v301, %v297
    %v338 = vpack.c.b16 %v302, %v298
    %v339 = vpack.c.b16 %v303, %v299
    %v340 = vpack.c.b16 %v308, %v304
    %v341 = vpack.c.b16 %v309, %v305
    %v342 = vpack.c.b16 %v310, %v306
    %v343 = vpack.c.b16 %v311, %v307
    %376 = vmatpush.bf16.msra.mxu0 %v340
    %377 = vmatpush.bf16.msra.mxu0 %v336
    %378 = vmatpush.bf16.msra.mxu0 %v332
    %379 = vmatpush.bf16.msra.mxu0 %v328
    %380 = vmatpush.bf16.msra.mxu0 %v324
    %381 = vmatpush.bf16.msra.mxu0 %v320
    %382 = vmatpush.bf16.msra.mxu0 %v316
    %383 = vmatpush.bf16.msra.mxu0 %v312
    %384 = vmatmul.bf16.gmra.mxu0 %v200
    %v385 = vpop.f32.mrf.mxu0
    %v386 = vadd.f32 %v160, %v385
    %v387 = vpop.f32.mrf.mxu0
    %v388 = vadd.f32 %v160, %v387
    %389 = vmatmul.bf16.gmra.mxu0 %v201
    %v390 = vpop.f32.mrf.mxu0
    %v391 = vadd.f32 %v160, %v390
    %v392 = vpop.f32.mrf.mxu0
    %v393 = vadd.f32 %v160, %v392
    %394 = vmatmul.bf16.gmra.mxu0 %v202
    %v395 = vpop.f32.mrf.mxu0
    %v396 = vadd.f32 %v160, %v395
    %v397 = vpop.f32.mrf.mxu0
    %v398 = vadd.f32 %v160, %v397
    %399 = vmatmul.bf16.gmra.mxu0 %v203
    %v400 = vpop.f32.mrf.mxu0
    %v401 = vadd.f32 %v160, %v400
    %v402 = vpop.f32.mrf.mxu0
    %v403 = vadd.f32 %v160, %v402
    %404 = vmatmul.bf16.gmra.mxu0 %v204
    %v405 = vpop.f32.mrf.mxu0
    %v406 = vadd.f32 %v160, %v405
    %v407 = vpop.f32.mrf.mxu0
    %v408 = vadd.f32 %v160, %v407
    %409 = vmatmul.bf16.gmra.mxu0 %v205
    %v410 = vpop.f32.mrf.mxu0
    %v411 = vadd.f32 %v160, %v410
    %v412 = vpop.f32.mrf.mxu0
    %v413 = vadd.f32 %v160, %v412
    %414 = vmatmul.bf16.gmra.mxu0 %v206
    %v415 = vpop.f32.mrf.mxu0
    %v416 = vadd.f32 %v160, %v415
    %v417 = vpop.f32.mrf.mxu0
    %v418 = vadd.f32 %v160, %v417
    %419 = vmatmul.bf16.gmra.mxu0 %v207
    %v420 = vpop.f32.mrf.mxu0
    %v421 = vadd.f32 %v160, %v420
    %v422 = vpop.f32.mrf.mxu0
    %v423 = vadd.f32 %v160, %v422
    %424 = vdwg.mxu0
    %425 = vmatpush.bf16.msra.mxu0 %v341
    %426 = vmatpush.bf16.msra.mxu0 %v337
    %427 = vmatpush.bf16.msra.mxu0 %v333
    %428 = vmatpush.bf16.msra.mxu0 %v329
    %429 = vmatpush.bf16.msra.mxu0 %v325
    %430 = vmatpush.bf16.msra.mxu0 %v321
    %431 = vmatpush.bf16.msra.mxu0 %v317
    %432 = vmatpush.bf16.msra.mxu0 %v313
    %433 = vmatmul.bf16.gmra.mxu0 %v200
    %v434 = vpop.f32.mrf.mxu0
    %v435 = vadd.f32 %v161, %v434
    %v436 = vpop.f32.mrf.mxu0
    %v437 = vadd.f32 %v161, %v436
    %438 = vmatmul.bf16.gmra.mxu0 %v201
    %v439 = vpop.f32.mrf.mxu0
    %v440 = vadd.f32 %v161, %v439
    %v441 = vpop.f32.mrf.mxu0
    %v442 = vadd.f32 %v161, %v441
    %443 = vmatmul.bf16.gmra.mxu0 %v202
    %v444 = vpop.f32.mrf.mxu0
    %v445 = vadd.f32 %v161, %v444
    %v446 = vpop.f32.mrf.mxu0
    %v447 = vadd.f32 %v161, %v446
    %448 = vmatmul.bf16.gmra.mxu0 %v203
    %v449 = vpop.f32.mrf.mxu0
    %v450 = vadd.f32 %v161, %v449
    %v451 = vpop.f32.mrf.mxu0
    %v452 = vadd.f32 %v161, %v451
    %453 = vmatmul.bf16.gmra.mxu0 %v204
    %v454 = vpop.f32.mrf.mxu0
    %v455 = vadd.f32 %v161, %v454
    %v456 = vpop.f32.mrf.mxu0
    %v457 = vadd.f32 %v161, %v456
    %458 = vmatmul.bf16.gmra.mxu0 %v205
    %v459 = vpop.f32.mrf.mxu0
    %v460 = vadd.f32 %v161, %v459
    %v461 = vpop.f32.mrf.mxu0
    %v462 = vadd.f32 %v161, %v461
    %463 = vmatmul.bf16.gmra.mxu0 %v206
    %v464 = vpop.f32.mrf.mxu0
    %v465 = vadd.f32 %v161, %v464
    %v466 = vpop.f32.mrf.mxu0
    %v467 = vadd.f32 %v161, %v466
    %468 = vmatmul.bf16.gmra.mxu0 %v207
    %v469 = vpop.f32.mrf.mxu0
    %v470 = vadd.f32 %v161, %v469
    %v471 = vpop.f32.mrf.mxu0
    %v472 = vadd.f32 %v161, %v471
    %473 = vdwg.mxu0
    %474 = vmatpush.bf16.msra.mxu0 %v342
    %475 = vmatpush.bf16.msra.mxu0 %v338
    %476 = vmatpush.bf16.msra.mxu0 %v334
    %477 = vmatpush.bf16.msra.mxu0 %v330
    %478 = vmatpush.bf16.msra.mxu0 %v326
    %479 = vmatpush.bf16.msra.mxu0 %v322
    %480 = vmatpush.bf16.msra.mxu0 %v318
    %481 = vmatpush.bf16.msra.mxu0 %v314
    %482 = vmatmul.bf16.gmra.mxu0 %v200
    %v483 = vpop.f32.mrf.mxu0
    %v484 = vadd.f32 %v162, %v483
    %v485 = vpop.f32.mrf.mxu0
    %v486 = vadd.f32 %v162, %v485
    %487 = vmatmul.bf16.gmra.mxu0 %v201
    %v488 = vpop.f32.mrf.mxu0
    %v489 = vadd.f32 %v162, %v488
    %v490 = vpop.f32.mrf.mxu0
    %v491 = vadd.f32 %v162, %v490
    %492 = vmatmul.bf16.gmra.mxu0 %v202
    %v493 = vpop.f32.mrf.mxu0
    %v494 = vadd.f32 %v162, %v493
    %v495 = vpop.f32.mrf.mxu0
    %v496 = vadd.f32 %v162, %v495
    %497 = vmatmul.bf16.gmra.mxu0 %v203
    %v498 = vpop.f32.mrf.mxu0
    %v499 = vadd.f32 %v162, %v498
    %v500 = vpop.f32.mrf.mxu0
    %v501 = vadd.f32 %v162, %v500
    %502 = vmatmul.bf16.gmra.mxu0 %v204
    %v503 = vpop.f32.mrf.mxu0
    %v504 = vadd.f32 %v162, %v503
    %v505 = vpop.f32.mrf.mxu0
    %v506 = vadd.f32 %v162, %v505
    %507 = vmatmul.bf16.gmra.mxu0 %v205
    %v508 = vpop.f32.mrf.mxu0
    %v509 = vadd.f32 %v162, %v508
    %v510 = vpop.f32.mrf.mxu0
    %v511 = vadd.f32 %v162, %v510
    %512 = vmatmul.bf16.gmra.mxu0 %v206
    %v513 = vpop.f32.mrf.mxu0
    %v514 = vadd.f32 %v162, %v513
    %v515 = vpop.f32.mrf.mxu0
    %v516 = vadd.f32 %v162, %v515
    %517 = vmatmul.bf16.gmra.mxu0 %v207
    %v518 = vpop.f32.mrf.mxu0
    %v519 = vadd.f32 %v162, %v518
    %v520 = vpop.f32.mrf.mxu0
    %v521 = vadd.f32 %v162, %v520
    %522 = vdwg.mxu0
    %523 = vmatpush.bf16.msra.mxu0 %v343
    %524 = vmatpush.bf16.msra.mxu0 %v339
    %525 = vmatpush.bf16.msra.mxu0 %v335
    %526 = vmatpush.bf16.msra.mxu0 %v331
    %527 = vmatpush.bf16.msra.mxu0 %v327
    %528 = vmatpush.bf16.msra.mxu0 %v323
    %529 = vmatpush.bf16.msra.mxu0 %v319
    %530 = vmatpush.bf16.msra.mxu0 %v315
    %531 = vmatmul.bf16.gmra.mxu0 %v200
    %v532 = vpop.f32.mrf.mxu0
    %v533 = vadd.f32 %v163, %v532
    %v534 = vpop.f32.mrf.mxu0
    %v535 = vadd.f32 %v163, %v534
    %536 = vmatmul.bf16.gmra.mxu0 %v201
    %v537 = vpop.f32.mrf.mxu0
    %v538 = vadd.f32 %v163, %v537
    %v539 = vpop.f32.mrf.mxu0
    %v540 = vadd.f32 %v163, %v539
    %541 = vmatmul.bf16.gmra.mxu0 %v202
    %v542 = vpop.f32.mrf.mxu0
    %v543 = vadd.f32 %v163, %v542
    %v544 = vpop.f32.mrf.mxu0
    %v545 = vadd.f32 %v163, %v544
    %546 = vmatmul.bf16.gmra.mxu0 %v203
    %v547 = vpop.f32.mrf.mxu0
    %v548 = vadd.f32 %v163, %v547
    %v549 = vpop.f32.mrf.mxu0
    %v550 = vadd.f32 %v163, %v549
    %551 = vmatmul.bf16.gmra.mxu0 %v204
    %v552 = vpop.f32.mrf.mxu0
    %v553 = vadd.f32 %v163, %v552
    %v554 = vpop.f32.mrf.mxu0
    %v555 = vadd.f32 %v163, %v554
    %556 = vmatmul.bf16.gmra.mxu0 %v205
    %v557 = vpop.f32.mrf.mxu0
    %v558 = vadd.f32 %v163, %v557
    %v559 = vpop.f32.mrf.mxu0
    %v560 = vadd.f32 %v163, %v559
    %561 = vmatmul.bf16.gmra.mxu0 %v206
    %v562 = vpop.f32.mrf.mxu0
    %v563 = vadd.f32 %v163, %v562
    %v564 = vpop.f32.mrf.mxu0
    %v565 = vadd.f32 %v163, %v564
    %566 = vmatmul.bf16.gmra.mxu0 %v207
    %v567 = vpop.f32.mrf.mxu0
    %v568 = vadd.f32 %v163, %v567
    %v569 = vpop.f32.mrf.mxu0
    %v570 = vadd.f32 %v163, %v569
    %571 = vdwg.mxu0
    %v572 = vmax.f32 %v386, 0.0
    %v573 = vmax.f32 %v435, 0.0
    %v574 = vmax.f32 %v484, 0.0
    %v575 = vmax.f32 %v533, 0.0
    %v576 = vmax.f32 %v388, 0.0
    %v577 = vmax.f32 %v437, 0.0
    %v578 = vmax.f32 %v486, 0.0
    %v579 = vmax.f32 %v535, 0.0
    %v580 = vmax.f32 %v391, 0.0
    %v581 = vmax.f32 %v440, 0.0
    %v582 = vmax.f32 %v489, 0.0
    %v583 = vmax.f32 %v538, 0.0
    %v584 = vmax.f32 %v393, 0.0
    %v585 = vmax.f32 %v442, 0.0
    %v586 = vmax.f32 %v491, 0.0
    %v587 = vmax.f32 %v540, 0.0
    %v588 = vmax.f32 %v396, 0.0
    %v589 = vmax.f32 %v445, 0.0
    %v590 = vmax.f32 %v494, 0.0
    %v591 = vmax.f32 %v543, 0.0
    %v592 = vmax.f32 %v398, 0.0
    %v593 = vmax.f32 %v447, 0.0
    %v594 = vmax.f32 %v496, 0.0
    %v595 = vmax.f32 %v545, 0.0
    %v596 = vmax.f32 %v401, 0.0
    %v597 = vmax.f32 %v450, 0.0
    %v598 = vmax.f32 %v499, 0.0
    %v599 = vmax.f32 %v548, 0.0
    %v600 = vmax.f32 %v403, 0.0
    %v601 = vmax.f32 %v452, 0.0
    %v602 = vmax.f32 %v501, 0.0
    %v603 = vmax.f32 %v550, 0.0
    %v604 = vmax.f32 %v406, 0.0
    %v605 = vmax.f32 %v455, 0.0
    %v606 = vmax.f32 %v504, 0.0
    %v607 = vmax.f32 %v553, 0.0
    %v608 = vmax.f32 %v408, 0.0
    %v609 = vmax.f32 %v457, 0.0
    %v610 = vmax.f32 %v506, 0.0
    %v611 = vmax.f32 %v555, 0.0
    %v612 = vmax.f32 %v411, 0.0
    %v613 = vmax.f32 %v460, 0.0
    %v614 = vmax.f32 %v509, 0.0
    %v615 = vmax.f32 %v558, 0.0
    %v616 = vmax.f32 %v413, 0.0
    %v617 = vmax.f32 %v462, 0.0
    %v618 = vmax.f32 %v511, 0.0
    %v619 = vmax.f32 %v560, 0.0
    %v620 = vmax.f32 %v416, 0.0
    %v621 = vmax.f32 %v465, 0.0
    %v622 = vmax.f32 %v514, 0.0
    %v623 = vmax.f32 %v563, 0.0
    %v624 = vmax.f32 %v418, 0.0
    %v625 = vmax.f32 %v467, 0.0
    %v626 = vmax.f32 %v516, 0.0
    %v627 = vmax.f32 %v565, 0.0
    %v628 = vmax.f32 %v421, 0.0
    %v629 = vmax.f32 %v470, 0.0
    %v630 = vmax.f32 %v519, 0.0
    %v631 = vmax.f32 %v568, 0.0
    %v632 = vmax.f32 %v423, 0.0
    %v633 = vmax.f32 %v472, 0.0
    %v634 = vmax.f32 %v521, 0.0
    %v635 = vmax.f32 %v570, 0.0
    %v636 = vpack.c.bf16 %v576, %v572
    %v637 = vpack.c.bf16 %v577, %v573
    %v638 = vpack.c.bf16 %v578, %v574
    %v639 = vpack.c.bf16 %v579, %v575
    %v640 = vpack.c.bf16 %v584, %v580
    %v641 = vpack.c.bf16 %v585, %v581
    %v642 = vpack.c.bf16 %v586, %v582
    %v643 = vpack.c.bf16 %v587, %v583
    %v644 = vpack.c.bf16 %v592, %v588
    %v645 = vpack.c.bf16 %v593, %v589
    %v646 = vpack.c.bf16 %v594, %v590
    %v647 = vpack.c.bf16 %v595, %v591
    %v648 = vpack.c.bf16 %v600, %v596
    %v649 = vpack.c.bf16 %v601, %v597
    %v650 = vpack.c.bf16 %v602, %v598
    %v651 = vpack.c.bf16 %v603, %v599
    %v652 = vpack.c.bf16 %v608, %v604
    %v653 = vpack.c.bf16 %v609, %v605
    %v654 = vpack.c.bf16 %v610, %v606
    %v655 = vpack.c.bf16 %v611, %v607
    %v656 = vpack.c.bf16 %v616, %v612
    %v657 = vpack.c.bf16 %v617, %v613
    %v658 = vpack.c.bf16 %v618, %v614
    %v659 = vpack.c.bf16 %v619, %v615
    %v660 = vpack.c.bf16 %v624, %v620
    %v661 = vpack.c.bf16 %v625, %v621
    %v662 = vpack.c.bf16 %v626, %v622
    %v663 = vpack.c.bf16 %v627, %v623
    %v664 = vpack.c.bf16 %v632, %v628
    %v665 = vpack.c.bf16 %v633, %v629
    %v666 = vpack.c.bf16 %v634, %v630
    %v667 = vpack.c.bf16 %v635, %v631
    %v668 = vld [vmem:[#allocation8] sm:$0xff]
    %v669 = vld [vmem:[#allocation8 + $0x8] sm:$0xff]
    %v670 = vld [vmem:[#allocation8 + $0x10] sm:$0xff]
    %v671 = vld [vmem:[#allocation8 + $0x18] sm:$0xff]
    %v672 = vld [vmem:[#allocation8 + $0x20] sm:$0xff]
    %v673 = vld [vmem:[#allocation8 + $0x28] sm:$0xff]
    %v674 = vld [vmem:[#allocation8 + $0x30] sm:$0xff]
    %v675 = vld [vmem:[#allocation8 + $0x38] sm:$0xff]
    %v676 = vld [vmem:[#allocation8 + $0x40] sm:$0xff]
    %v677 = vld [vmem:[#allocation8 + $0x48] sm:$0xff]
    %v678 = vld [vmem:[#allocation8 + $0x50] sm:$0xff]
    %v679 = vld [vmem:[#allocation8 + $0x58] sm:$0xff]
    %v680 = vld [vmem:[#allocation8 + $0x60] sm:$0xff]
    %v681 = vld [vmem:[#allocation8 + $0x68] sm:$0xff]
    %v682 = vld [vmem:[#allocation8 + $0x70] sm:$0xff]
    %v683 = vld [vmem:[#allocation8 + $0x78] sm:$0xff]
    %v684 = vld [vmem:[#allocation8 + $0x80] sm:$0xff]
    %v685 = vld [vmem:[#allocation8 + $0x88] sm:$0xff]
    %v686 = vld [vmem:[#allocation8 + $0x90] sm:$0xff]
    %v687 = vld [vmem:[#allocation8 + $0x98] sm:$0xff]
    %v688 = vld [vmem:[#allocation8 + $0xa0] sm:$0xff]
    %v689 = vld [vmem:[#allocation8 + $0xa8] sm:$0xff]
    %v690 = vld [vmem:[#allocation8 + $0xb0] sm:$0xff]
    %v691 = vld [vmem:[#allocation8 + $0xb8] sm:$0xff]
    %v692 = vld [vmem:[#allocation8 + $0xc0] sm:$0xff]
    %v693 = vld [vmem:[#allocation8 + $0xc8] sm:$0xff]
    %v694 = vld [vmem:[#allocation8 + $0xd0] sm:$0xff]
    %v695 = vld [vmem:[#allocation8 + $0xd8] sm:$0xff]
    %v696 = vld [vmem:[#allocation8 + $0xe0] sm:$0xff]
    %v697 = vld [vmem:[#allocation8 + $0xe8] sm:$0xff]
    %v698 = vld [vmem:[#allocation8 + $0xf0] sm:$0xff]
    %v699 = vld [vmem:[#allocation8 + $0xf8] sm:$0xff]
    %v700 = vld [vmem:[#allocation8 + $0x100] sm:$0xff]
    %v701 = vld [vmem:[#allocation8 + $0x108] sm:$0xff]
    %v702 = vld [vmem:[#allocation8 + $0x110] sm:$0xff]
    %v703 = vld [vmem:[#allocation8 + $0x118] sm:$0xff]
    %v704 = vld [vmem:[#allocation8 + $0x120] sm:$0xff]
    %v705 = vld [vmem:[#allocation8 + $0x128] sm:$0xff]
    %v706 = vld [vmem:[#allocation8 + $0x130] sm:$0xff]
    %v707 = vld [vmem:[#allocation8 + $0x138] sm:$0xff]
    %v708 = vld [vmem:[#allocation8 + $0x140] sm:$0xff]
    %v709 = vld [vmem:[#allocation8 + $0x148] sm:$0xff]
    %v710 = vld [vmem:[#allocation8 + $0x150] sm:$0xff]
    %v711 = vld [vmem:[#allocation8 + $0x158] sm:$0xff]
    %v712 = vld [vmem:[#allocation8 + $0x160] sm:$0xff]
    %v713 = vld [vmem:[#allocation8 + $0x168] sm:$0xff]
    %v714 = vld [vmem:[#allocation8 + $0x170] sm:$0xff]
    %v715 = vld [vmem:[#allocation8 + $0x178] sm:$0xff]
    %v716 = vld [vmem:[#allocation8 + $0x180] sm:$0xff]
    %v717 = vld [vmem:[#allocation8 + $0x188] sm:$0xff]
    %v718 = vld [vmem:[#allocation8 + $0x190] sm:$0xff]
    %v719 = vld [vmem:[#allocation8 + $0x198] sm:$0xff]
    %v720 = vld [vmem:[#allocation8 + $0x1a0] sm:$0xff]
    %v721 = vld [vmem:[#allocation8 + $0x1a8] sm:$0xff]
    %v722 = vld [vmem:[#allocation8 + $0x1b0] sm:$0xff]
    %v723 = vld [vmem:[#allocation8 + $0x1b8] sm:$0xff]
    %v724 = vld [vmem:[#allocation8 + $0x1c0] sm:$0xff]
    %v725 = vld [vmem:[#allocation8 + $0x1c8] sm:$0xff]
    %v726 = vld [vmem:[#allocation8 + $0x1d0] sm:$0xff]
    %v727 = vld [vmem:[#allocation8 + $0x1d8] sm:$0xff]
    %v728 = vld [vmem:[#allocation8 + $0x1e0] sm:$0xff]
    %v729 = vld [vmem:[#allocation8 + $0x1e8] sm:$0xff]
    %v730 = vld [vmem:[#allocation8 + $0x1f0] sm:$0xff]
    %v731 = vld [vmem:[#allocation8 + $0x1f8] sm:$0xff]
    %v732 = vld [vmem:[#allocation8 + $0x200] sm:$0xff]
    %v733 = vld [vmem:[#allocation8 + $0x208] sm:$0xff]
    %v734 = vld [vmem:[#allocation8 + $0x210] sm:$0xff]
    %v735 = vld [vmem:[#allocation8 + $0x218] sm:$0xff]
    %v736 = vld [vmem:[#allocation8 + $0x220] sm:$0xff]
    %v737 = vld [vmem:[#allocation8 + $0x228] sm:$0xff]
    %v738 = vld [vmem:[#allocation8 + $0x230] sm:$0xff]
    %v739 = vld [vmem:[#allocation8 + $0x238] sm:$0xff]
    %v740 = vld [vmem:[#allocation8 + $0x240] sm:$0xff]
    %v741 = vld [vmem:[#allocation8 + $0x248] sm:$0xff]
    %v742 = vld [vmem:[#allocation8 + $0x250] sm:$0xff]
    %v743 = vld [vmem:[#allocation8 + $0x258] sm:$0xff]
    %v744 = vld [vmem:[#allocation8 + $0x260] sm:$0xff]
    %v745 = vld [vmem:[#allocation8 + $0x268] sm:$0xff]
    %v746 = vld [vmem:[#allocation8 + $0x270] sm:$0xff]
    %v747 = vld [vmem:[#allocation8 + $0x278] sm:$0xff]
    %v748 = vld [vmem:[#allocation8 + $0x280] sm:$0xff]
    %v749 = vld [vmem:[#allocation8 + $0x288] sm:$0xff]
    %v750 = vld [vmem:[#allocation8 + $0x290] sm:$0xff]
    %v751 = vld [vmem:[#allocation8 + $0x298] sm:$0xff]
    %v752 = vld [vmem:[#allocation8 + $0x2a0] sm:$0xff]
    %v753 = vld [vmem:[#allocation8 + $0x2a8] sm:$0xff]
    %v754 = vld [vmem:[#allocation8 + $0x2b0] sm:$0xff]
    %v755 = vld [vmem:[#allocation8 + $0x2b8] sm:$0xff]
    %v756 = vld [vmem:[#allocation8 + $0x2c0] sm:$0xff]
    %v757 = vld [vmem:[#allocation8 + $0x2c8] sm:$0xff]
    %v758 = vld [vmem:[#allocation8 + $0x2d0] sm:$0xff]
    %v759 = vld [vmem:[#allocation8 + $0x2d8] sm:$0xff]
    %v760 = vld [vmem:[#allocation8 + $0x2e0] sm:$0xff]
    %v761 = vld [vmem:[#allocation8 + $0x2e8] sm:$0xff]
    %v762 = vld [vmem:[#allocation8 + $0x2f0] sm:$0xff]
    %v763 = vld [vmem:[#allocation8 + $0x2f8] sm:$0xff]
    %v764 = vld [vmem:[#allocation8 + $0x300] sm:$0xff]
    %v765 = vld [vmem:[#allocation8 + $0x308] sm:$0xff]
    %v766 = vld [vmem:[#allocation8 + $0x310] sm:$0xff]
    %v767 = vld [vmem:[#allocation8 + $0x318] sm:$0xff]
    %v768 = vld [vmem:[#allocation8 + $0x320] sm:$0xff]
    %v769 = vld [vmem:[#allocation8 + $0x328] sm:$0xff]
    %v770 = vld [vmem:[#allocation8 + $0x330] sm:$0xff]
    %v771 = vld [vmem:[#allocation8 + $0x338] sm:$0xff]
    %v772 = vld [vmem:[#allocation8 + $0x340] sm:$0xff]
    %v773 = vld [vmem:[#allocation8 + $0x348] sm:$0xff]
    %v774 = vld [vmem:[#allocation8 + $0x350] sm:$0xff]
    %v775 = vld [vmem:[#allocation8 + $0x358] sm:$0xff]
    %v776 = vld [vmem:[#allocation8 + $0x360] sm:$0xff]
    %v777 = vld [vmem:[#allocation8 + $0x368] sm:$0xff]
    %v778 = vld [vmem:[#allocation8 + $0x370] sm:$0xff]
    %v779 = vld [vmem:[#allocation8 + $0x378] sm:$0xff]
    %v780 = vld [vmem:[#allocation8 + $0x380] sm:$0xff]
    %v781 = vld [vmem:[#allocation8 + $0x388] sm:$0xff]
    %v782 = vld [vmem:[#allocation8 + $0x390] sm:$0xff]
    %v783 = vld [vmem:[#allocation8 + $0x398] sm:$0xff]
    %v784 = vld [vmem:[#allocation8 + $0x3a0] sm:$0xff]
    %v785 = vld [vmem:[#allocation8 + $0x3a8] sm:$0xff]
    %v786 = vld [vmem:[#allocation8 + $0x3b0] sm:$0xff]
    %v787 = vld [vmem:[#allocation8 + $0x3b8] sm:$0xff]
    %v788 = vld [vmem:[#allocation8 + $0x3c0] sm:$0xff]
    %v789 = vld [vmem:[#allocation8 + $0x3c8] sm:$0xff]
    %v790 = vld [vmem:[#allocation8 + $0x3d0] sm:$0xff]
    %v791 = vld [vmem:[#allocation8 + $0x3d8] sm:$0xff]
    %v792 = vld [vmem:[#allocation8 + $0x3e0] sm:$0xff]
    %v793 = vld [vmem:[#allocation8 + $0x3e8] sm:$0xff]
    %v794 = vld [vmem:[#allocation8 + $0x3f0] sm:$0xff]
    %v795 = vld [vmem:[#allocation8 + $0x3f8] sm:$0xff]
    %v796 = vld [vmem:[%s4] sm:$0xf]
    %v798 = vperm.slane %v796, 0
    %v799 = vperm.slane %v796, 1
    %v800 = vperm.slane %v796, 2
    %v801 = vperm.slane %v796, 3
    %v934 = vunpack.c.l.b16 %v668
    %v935 = vunpack.c.h.b16 %v668
    %v936 = vunpack.c.l.b16 %v669
    %v937 = vunpack.c.h.b16 %v669
    %v938 = vunpack.c.l.b16 %v670
    %v939 = vunpack.c.h.b16 %v670
    %v940 = vunpack.c.l.b16 %v671
    %v941 = vunpack.c.h.b16 %v671
    %v942 = vunpack.c.l.b16 %v672
    %v943 = vunpack.c.h.b16 %v672
    %v944 = vunpack.c.l.b16 %v673
    %v945 = vunpack.c.h.b16 %v673
    %v946 = vunpack.c.l.b16 %v674
    %v947 = vunpack.c.h.b16 %v674
    %v948 = vunpack.c.l.b16 %v675
    %v949 = vunpack.c.h.b16 %v675
    %v950 = vunpack.c.l.b16 %v676
    %v951 = vunpack.c.h.b16 %v676
    %v952 = vunpack.c.l.b16 %v677
    %v953 = vunpack.c.h.b16 %v677
    %v954 = vunpack.c.l.b16 %v678
    %v955 = vunpack.c.h.b16 %v678
    %v956 = vunpack.c.l.b16 %v679
    %v957 = vunpack.c.h.b16 %v679
    %v958 = vunpack.c.l.b16 %v680
    %v959 = vunpack.c.h.b16 %v680
    %v960 = vunpack.c.l.b16 %v681
    %v961 = vunpack.c.h.b16 %v681
    %v962 = vunpack.c.l.b16 %v682
    %v963 = vunpack.c.h.b16 %v682
    %v964 = vunpack.c.l.b16 %v683
    %v965 = vunpack.c.h.b16 %v683
    %v966 = vunpack.c.l.b16 %v684
    %v967 = vunpack.c.h.b16 %v684
    %v968 = vunpack.c.l.b16 %v685
    %v969 = vunpack.c.h.b16 %v685
    %v970 = vunpack.c.l.b16 %v686
    %v971 = vunpack.c.h.b16 %v686
    %v972 = vunpack.c.l.b16 %v687
    %v973 = vunpack.c.h.b16 %v687
    %v974 = vunpack.c.l.b16 %v688
    %v975 = vunpack.c.h.b16 %v688
    %v976 = vunpack.c.l.b16 %v689
    %v977 = vunpack.c.h.b16 %v689
    %v978 = vunpack.c.l.b16 %v690
    %v979 = vunpack.c.h.b16 %v690
    %v980 = vunpack.c.l.b16 %v691
    %v981 = vunpack.c.h.b16 %v691
    %v982 = vunpack.c.l.b16 %v692
    %v983 = vunpack.c.h.b16 %v692
    %v984 = vunpack.c.l.b16 %v693
    %v985 = vunpack.c.h.b16 %v693
    %v986 = vunpack.c.l.b16 %v694
    %v987 = vunpack.c.h.b16 %v694
    %v988 = vunpack.c.l.b16 %v695
    %v989 = vunpack.c.h.b16 %v695
    %v990 = vunpack.c.l.b16 %v696
    %v991 = vunpack.c.h.b16 %v696
    %v992 = vunpack.c.l.b16 %v697
    %v993 = vunpack.c.h.b16 %v697
    %v994 = vunpack.c.l.b16 %v698
    %v995 = vunpack.c.h.b16 %v698
    %v996 = vunpack.c.l.b16 %v699
    %v997 = vunpack.c.h.b16 %v699
    %v998 = vunpack.c.l.b16 %v700
    %v999 = vunpack.c.h.b16 %v700
    %v1000 = vunpack.c.l.b16 %v701
    %v1001 = vunpack.c.h.b16 %v701
    %v1002 = vunpack.c.l.b16 %v702
    %v1003 = vunpack.c.h.b16 %v702
    %v1004 = vunpack.c.l.b16 %v703
    %v1005 = vunpack.c.h.b16 %v703
    %v1006 = vunpack.c.l.b16 %v704
    %v1007 = vunpack.c.h.b16 %v704
    %v1008 = vunpack.c.l.b16 %v705
    %v1009 = vunpack.c.h.b16 %v705
    %v1010 = vunpack.c.l.b16 %v706
    %v1011 = vunpack.c.h.b16 %v706
    %v1012 = vunpack.c.l.b16 %v707
    %v1013 = vunpack.c.h.b16 %v707
    %v1014 = vunpack.c.l.b16 %v708
    %v1015 = vunpack.c.h.b16 %v708
    %v1016 = vunpack.c.l.b16 %v709
    %v1017 = vunpack.c.h.b16 %v709
    %v1018 = vunpack.c.l.b16 %v710
    %v1019 = vunpack.c.h.b16 %v710
    %v1020 = vunpack.c.l.b16 %v711
    %v1021 = vunpack.c.h.b16 %v711
    %v1022 = vunpack.c.l.b16 %v712
    %v1023 = vunpack.c.h.b16 %v712
    %v1024 = vunpack.c.l.b16 %v713
    %v1025 = vunpack.c.h.b16 %v713
    %v1026 = vunpack.c.l.b16 %v714
    %v1027 = vunpack.c.h.b16 %v714
    %v1028 = vunpack.c.l.b16 %v715
    %v1029 = vunpack.c.h.b16 %v715
    %v1030 = vunpack.c.l.b16 %v716
    %v1031 = vunpack.c.h.b16 %v716
    %v1032 = vunpack.c.l.b16 %v717
    %v1033 = vunpack.c.h.b16 %v717
    %v1034 = vunpack.c.l.b16 %v718
    %v1035 = vunpack.c.h.b16 %v718
    %v1036 = vunpack.c.l.b16 %v719
    %v1037 = vunpack.c.h.b16 %v719
    %v1038 = vunpack.c.l.b16 %v720
    %v1039 = vunpack.c.h.b16 %v720
    %v1040 = vunpack.c.l.b16 %v721
    %v1041 = vunpack.c.h.b16 %v721
    %v1042 = vunpack.c.l.b16 %v722
    %v1043 = vunpack.c.h.b16 %v722
    %v1044 = vunpack.c.l.b16 %v723
    %v1045 = vunpack.c.h.b16 %v723
    %v1046 = vunpack.c.l.b16 %v724
    %v1047 = vunpack.c.h.b16 %v724
    %v1048 = vunpack.c.l.b16 %v725
    %v1049 = vunpack.c.h.b16 %v725
    %v1050 = vunpack.c.l.b16 %v726
    %v1051 = vunpack.c.h.b16 %v726
    %v1052 = vunpack.c.l.b16 %v727
    %v1053 = vunpack.c.h.b16 %v727
    %v1054 = vunpack.c.l.b16 %v728
    %v1055 = vunpack.c.h.b16 %v728
    %v1056 = vunpack.c.l.b16 %v729
    %v1057 = vunpack.c.h.b16 %v729
    %v1058 = vunpack.c.l.b16 %v730
    %v1059 = vunpack.c.h.b16 %v730
    %v1060 = vunpack.c.l.b16 %v731
    %v1061 = vunpack.c.h.b16 %v731
    %v1062 = vunpack.c.l.b16 %v732
    %v1063 = vunpack.c.h.b16 %v732
    %v1064 = vunpack.c.l.b16 %v733
    %v1065 = vunpack.c.h.b16 %v733
    %v1066 = vunpack.c.l.b16 %v734
    %v1067 = vunpack.c.h.b16 %v734
    %v1068 = vunpack.c.l.b16 %v735
    %v1069 = vunpack.c.h.b16 %v735
    %v1070 = vunpack.c.l.b16 %v736
    %v1071 = vunpack.c.h.b16 %v736
    %v1072 = vunpack.c.l.b16 %v737
    %v1073 = vunpack.c.h.b16 %v737
    %v1074 = vunpack.c.l.b16 %v738
    %v1075 = vunpack.c.h.b16 %v738
    %v1076 = vunpack.c.l.b16 %v739
    %v1077 = vunpack.c.h.b16 %v739
    %v1078 = vunpack.c.l.b16 %v740
    %v1079 = vunpack.c.h.b16 %v740
    %v1080 = vunpack.c.l.b16 %v741
    %v1081 = vunpack.c.h.b16 %v741
    %v1082 = vunpack.c.l.b16 %v742
    %v1083 = vunpack.c.h.b16 %v742
    %v1084 = vunpack.c.l.b16 %v743
    %v1085 = vunpack.c.h.b16 %v743
    %v1086 = vunpack.c.l.b16 %v744
    %v1087 = vunpack.c.h.b16 %v744
    %v1088 = vunpack.c.l.b16 %v745
    %v1089 = vunpack.c.h.b16 %v745
    %v1090 = vunpack.c.l.b16 %v746
    %v1091 = vunpack.c.h.b16 %v746
    %v1092 = vunpack.c.l.b16 %v747
    %v1093 = vunpack.c.h.b16 %v747
    %v1094 = vunpack.c.l.b16 %v748
    %v1095 = vunpack.c.h.b16 %v748
    %v1096 = vunpack.c.l.b16 %v749
    %v1097 = vunpack.c.h.b16 %v749
    %v1098 = vunpack.c.l.b16 %v750
    %v1099 = vunpack.c.h.b16 %v750
    %v1100 = vunpack.c.l.b16 %v751
    %v1101 = vunpack.c.h.b16 %v751
    %v1102 = vunpack.c.l.b16 %v752
    %v1103 = vunpack.c.h.b16 %v752
    %v1104 = vunpack.c.l.b16 %v753
    %v1105 = vunpack.c.h.b16 %v753
    %v1106 = vunpack.c.l.b16 %v754
    %v1107 = vunpack.c.h.b16 %v754
    %v1108 = vunpack.c.l.b16 %v755
    %v1109 = vunpack.c.h.b16 %v755
    %v1110 = vunpack.c.l.b16 %v756
    %v1111 = vunpack.c.h.b16 %v756
    %v1112 = vunpack.c.l.b16 %v757
    %v1113 = vunpack.c.h.b16 %v757
    %v1114 = vunpack.c.l.b16 %v758
    %v1115 = vunpack.c.h.b16 %v758
    %v1116 = vunpack.c.l.b16 %v759
    %v1117 = vunpack.c.h.b16 %v759
    %v1118 = vunpack.c.l.b16 %v760
    %v1119 = vunpack.c.h.b16 %v760
    %v1120 = vunpack.c.l.b16 %v761
    %v1121 = vunpack.c.h.b16 %v761
    %v1122 = vunpack.c.l.b16 %v762
    %v1123 = vunpack.c.h.b16 %v762
    %v1124 = vunpack.c.l.b16 %v763
    %v1125 = vunpack.c.h.b16 %v763
    %v1126 = vunpack.c.l.b16 %v764
    %v1127 = vunpack.c.h.b16 %v764
    %v1128 = vunpack.c.l.b16 %v765
    %v1129 = vunpack.c.h.b16 %v765
    %v1130 = vunpack.c.l.b16 %v766
    %v1131 = vunpack.c.h.b16 %v766
    %v1132 = vunpack.c.l.b16 %v767
    %v1133 = vunpack.c.h.b16 %v767
    %v1134 = vunpack.c.l.b16 %v768
    %v1135 = vunpack.c.h.b16 %v768
    %v1136 = vunpack.c.l.b16 %v769
    %v1137 = vunpack.c.h.b16 %v769
    %v1138 = vunpack.c.l.b16 %v770
    %v1139 = vunpack.c.h.b16 %v770
    %v1140 = vunpack.c.l.b16 %v771
    %v1141 = vunpack.c.h.b16 %v771
    %v1142 = vunpack.c.l.b16 %v772
    %v1143 = vunpack.c.h.b16 %v772
    %v1144 = vunpack.c.l.b16 %v773
    %v1145 = vunpack.c.h.b16 %v773
    %v1146 = vunpack.c.l.b16 %v774
    %v1147 = vunpack.c.h.b16 %v774
    %v1148 = vunpack.c.l.b16 %v775
    %v1149 = vunpack.c.h.b16 %v775
    %v1150 = vunpack.c.l.b16 %v776
    %v1151 = vunpack.c.h.b16 %v776
    %v1152 = vunpack.c.l.b16 %v777
    %v1153 = vunpack.c.h.b16 %v777
    %v1154 = vunpack.c.l.b16 %v778
    %v1155 = vunpack.c.h.b16 %v778
    %v1156 = vunpack.c.l.b16 %v779
    %v1157 = vunpack.c.h.b16 %v779
    %v1158 = vunpack.c.l.b16 %v780
    %v1159 = vunpack.c.h.b16 %v780
    %v1160 = vunpack.c.l.b16 %v781
    %v1161 = vunpack.c.h.b16 %v781
    %v1162 = vunpack.c.l.b16 %v782
    %v1163 = vunpack.c.h.b16 %v782
    %v1164 = vunpack.c.l.b16 %v783
    %v1165 = vunpack.c.h.b16 %v783
    %v1166 = vunpack.c.l.b16 %v784
    %v1167 = vunpack.c.h.b16 %v784
    %v1168 = vunpack.c.l.b16 %v785
    %v1169 = vunpack.c.h.b16 %v785
    %v1170 = vunpack.c.l.b16 %v786
    %v1171 = vunpack.c.h.b16 %v786
    %v1172 = vunpack.c.l.b16 %v787
    %v1173 = vunpack.c.h.b16 %v787
    %v1174 = vunpack.c.l.b16 %v788
    %v1175 = vunpack.c.h.b16 %v788
    %v1176 = vunpack.c.l.b16 %v789
    %v1177 = vunpack.c.h.b16 %v789
    %v1178 = vunpack.c.l.b16 %v790
    %v1179 = vunpack.c.h.b16 %v790
    %v1180 = vunpack.c.l.b16 %v791
    %v1181 = vunpack.c.h.b16 %v791
    %v1182 = vunpack.c.l.b16 %v792
    %v1183 = vunpack.c.h.b16 %v792
    %v1184 = vunpack.c.l.b16 %v793
    %v1185 = vunpack.c.h.b16 %v793
    %v1186 = vunpack.c.l.b16 %v794
    %v1187 = vunpack.c.h.b16 %v794
    %v1188 = vunpack.c.l.b16 %v795
    %v1189 = vunpack.c.h.b16 %v795
    %v1190 = vpack.c.b16 %v938, %v934
    %v1191 = vpack.c.b16 %v939, %v935
    %v1192 = vpack.c.b16 %v940, %v936
    %v1193 = vpack.c.b16 %v941, %v937
    %v1194 = vpack.c.b16 %v946, %v942
    %v1195 = vpack.c.b16 %v947, %v943
    %v1196 = vpack.c.b16 %v948, %v944
    %v1197 = vpack.c.b16 %v949, %v945
    %v1198 = vpack.c.b16 %v954, %v950
    %v1199 = vpack.c.b16 %v955, %v951
    %v1200 = vpack.c.b16 %v956, %v952
    %v1201 = vpack.c.b16 %v957, %v953
    %v1202 = vpack.c.b16 %v962, %v958
    %v1203 = vpack.c.b16 %v963, %v959
    %v1204 = vpack.c.b16 %v964, %v960
    %v1205 = vpack.c.b16 %v965, %v961
    %v1206 = vpack.c.b16 %v970, %v966
    %v1207 = vpack.c.b16 %v971, %v967
    %v1208 = vpack.c.b16 %v972, %v968
    %v1209 = vpack.c.b16 %v973, %v969
    %v1210 = vpack.c.b16 %v978, %v974
    %v1211 = vpack.c.b16 %v979, %v975
    %v1212 = vpack.c.b16 %v980, %v976
    %v1213 = vpack.c.b16 %v981, %v977
    %v1214 = vpack.c.b16 %v986, %v982
    %v1215 = vpack.c.b16 %v987, %v983
    %v1216 = vpack.c.b16 %v988, %v984
    %v1217 = vpack.c.b16 %v989, %v985
    %v1218 = vpack.c.b16 %v994, %v990
    %v1219 = vpack.c.b16 %v995, %v991
    %v1220 = vpack.c.b16 %v996, %v992
    %v1221 = vpack.c.b16 %v997, %v993
    %v1222 = vpack.c.b16 %v1002, %v998
    %v1223 = vpack.c.b16 %v1003, %v999
    %v1224 = vpack.c.b16 %v1004, %v1000
    %v1225 = vpack.c.b16 %v1005, %v1001
    %v1226 = vpack.c.b16 %v1010, %v1006
    %v1227 = vpack.c.b16 %v1011, %v1007
    %v1228 = vpack.c.b16 %v1012, %v1008
    %v1229 = vpack.c.b16 %v1013, %v1009
    %v1230 = vpack.c.b16 %v1018, %v1014
    %v1231 = vpack.c.b16 %v1019, %v1015
    %v1232 = vpack.c.b16 %v1020, %v1016
    %v1233 = vpack.c.b16 %v1021, %v1017
    %v1234 = vpack.c.b16 %v1026, %v1022
    %v1235 = vpack.c.b16 %v1027, %v1023
    %v1236 = vpack.c.b16 %v1028, %v1024
    %v1237 = vpack.c.b16 %v1029, %v1025
    %v1238 = vpack.c.b16 %v1034, %v1030
    %v1239 = vpack.c.b16 %v1035, %v1031
    %v1240 = vpack.c.b16 %v1036, %v1032
    %v1241 = vpack.c.b16 %v1037, %v1033
    %v1242 = vpack.c.b16 %v1042, %v1038
    %v1243 = vpack.c.b16 %v1043, %v1039
    %v1244 = vpack.c.b16 %v1044, %v1040
    %v1245 = vpack.c.b16 %v1045, %v1041
    %v1246 = vpack.c.b16 %v1050, %v1046
    %v1247 = vpack.c.b16 %v1051, %v1047
    %v1248 = vpack.c.b16 %v1052, %v1048
    %v1249 = vpack.c.b16 %v1053, %v1049
    %v1250 = vpack.c.b16 %v1058, %v1054
    %v1251 = vpack.c.b16 %v1059, %v1055
    %v1252 = vpack.c.b16 %v1060, %v1056
    %v1253 = vpack.c.b16 %v1061, %v1057
    %v1254 = vpack.c.b16 %v1066, %v1062
    %v1255 = vpack.c.b16 %v1067, %v1063
    %v1256 = vpack.c.b16 %v1068, %v1064
    %v1257 = vpack.c.b16 %v1069, %v1065
    %v1258 = vpack.c.b16 %v1074, %v1070
    %v1259 = vpack.c.b16 %v1075, %v1071
    %v1260 = vpack.c.b16 %v1076, %v1072
    %v1261 = vpack.c.b16 %v1077, %v1073
    %v1262 = vpack.c.b16 %v1082, %v1078
    %v1263 = vpack.c.b16 %v1083, %v1079
    %v1264 = vpack.c.b16 %v1084, %v1080
    %v1265 = vpack.c.b16 %v1085, %v1081
    %v1266 = vpack.c.b16 %v1090, %v1086
    %v1267 = vpack.c.b16 %v1091, %v1087
    %v1268 = vpack.c.b16 %v1092, %v1088
    %v1269 = vpack.c.b16 %v1093, %v1089
    %v1270 = vpack.c.b16 %v1098, %v1094
    %v1271 = vpack.c.b16 %v1099, %v1095
    %v1272 = vpack.c.b16 %v1100, %v1096
    %v1273 = vpack.c.b16 %v1101, %v1097
    %v1274 = vpack.c.b16 %v1106, %v1102
    %v1275 = vpack.c.b16 %v1107, %v1103
    %v1276 = vpack.c.b16 %v1108, %v1104
    %v1277 = vpack.c.b16 %v1109, %v1105
    %v1278 = vpack.c.b16 %v1114, %v1110
    %v1279 = vpack.c.b16 %v1115, %v1111
    %v1280 = vpack.c.b16 %v1116, %v1112
    %v1281 = vpack.c.b16 %v1117, %v1113
    %v1282 = vpack.c.b16 %v1122, %v1118
    %v1283 = vpack.c.b16 %v1123, %v1119
    %v1284 = vpack.c.b16 %v1124, %v1120
    %v1285 = vpack.c.b16 %v1125, %v1121
    %v1286 = vpack.c.b16 %v1130, %v1126
    %v1287 = vpack.c.b16 %v1131, %v1127
    %v1288 = vpack.c.b16 %v1132, %v1128
    %v1289 = vpack.c.b16 %v1133, %v1129
    %v1290 = vpack.c.b16 %v1138, %v1134
    %v1291 = vpack.c.b16 %v1139, %v1135
    %v1292 = vpack.c.b16 %v1140, %v1136
    %v1293 = vpack.c.b16 %v1141, %v1137
    %v1294 = vpack.c.b16 %v1146, %v1142
    %v1295 = vpack.c.b16 %v1147, %v1143
    %v1296 = vpack.c.b16 %v1148, %v1144
    %v1297 = vpack.c.b16 %v1149, %v1145
    %v1298 = vpack.c.b16 %v1154, %v1150
    %v1299 = vpack.c.b16 %v1155, %v1151
    %v1300 = vpack.c.b16 %v1156, %v1152
    %v1301 = vpack.c.b16 %v1157, %v1153
    %v1302 = vpack.c.b16 %v1162, %v1158
    %v1303 = vpack.c.b16 %v1163, %v1159
    %v1304 = vpack.c.b16 %v1164, %v1160
    %v1305 = vpack.c.b16 %v1165, %v1161
    %v1306 = vpack.c.b16 %v1170, %v1166
    %v1307 = vpack.c.b16 %v1171, %v1167
    %v1308 = vpack.c.b16 %v1172, %v1168
    %v1309 = vpack.c.b16 %v1173, %v1169
    %v1310 = vpack.c.b16 %v1178, %v1174
    %v1311 = vpack.c.b16 %v1179, %v1175
    %v1312 = vpack.c.b16 %v1180, %v1176
    %v1313 = vpack.c.b16 %v1181, %v1177
    %v1314 = vpack.c.b16 %v1186, %v1182
    %v1315 = vpack.c.b16 %v1187, %v1183
    %v1316 = vpack.c.b16 %v1188, %v1184
    %v1317 = vpack.c.b16 %v1189, %v1185
    %1446 = vmatpush.bf16.msra.mxu0 %v1218
    %1447 = vmatpush.bf16.msra.mxu0 %v1214
    %1448 = vmatpush.bf16.msra.mxu0 %v1210
    %1449 = vmatpush.bf16.msra.mxu0 %v1206
    %1450 = vmatpush.bf16.msra.mxu0 %v1202
    %1451 = vmatpush.bf16.msra.mxu0 %v1198
    %1452 = vmatpush.bf16.msra.mxu0 %v1194
    %1453 = vmatpush.bf16.msra.mxu0 %v1190
    %1454 = vmatmul.bf16.gmra.mxu0 %v636
    %v1455 = vpop.f32.mrf.mxu0
    %v1456 = vadd.f32 %v798, %v1455
    %v1457 = vpop.f32.mrf.mxu0
    %v1458 = vadd.f32 %v798, %v1457
    %1459 = vmatmul.bf16.gmra.mxu0 %v640
    %v1460 = vpop.f32.mrf.mxu0
    %v1461 = vadd.f32 %v798, %v1460
    %v1462 = vpop.f32.mrf.mxu0
    %v1463 = vadd.f32 %v798, %v1462
    %1464 = vmatmul.bf16.gmra.mxu0 %v644
    %v1465 = vpop.f32.mrf.mxu0
    %v1466 = vadd.f32 %v798, %v1465
    %v1467 = vpop.f32.mrf.mxu0
    %v1468 = vadd.f32 %v798, %v1467
    %1469 = vmatmul.bf16.gmra.mxu0 %v648
    %v1470 = vpop.f32.mrf.mxu0
    %v1471 = vadd.f32 %v798, %v1470
    %v1472 = vpop.f32.mrf.mxu0
    %v1473 = vadd.f32 %v798, %v1472
    %1474 = vmatmul.bf16.gmra.mxu0 %v652
    %v1475 = vpop.f32.mrf.mxu0
    %v1476 = vadd.f32 %v798, %v1475
    %v1477 = vpop.f32.mrf.mxu0
    %v1478 = vadd.f32 %v798, %v1477
    %1479 = vmatmul.bf16.gmra.mxu0 %v656
    %v1480 = vpop.f32.mrf.mxu0
    %v1481 = vadd.f32 %v798, %v1480
    %v1482 = vpop.f32.mrf.mxu0
    %v1483 = vadd.f32 %v798, %v1482
    %1484 = vmatmul.bf16.gmra.mxu0 %v660
    %v1485 = vpop.f32.mrf.mxu0
    %v1486 = vadd.f32 %v798, %v1485
    %v1487 = vpop.f32.mrf.mxu0
    %v1488 = vadd.f32 %v798, %v1487
    %1489 = vmatmul.bf16.gmra.mxu0 %v664
    %v1490 = vpop.f32.mrf.mxu0
    %v1491 = vadd.f32 %v798, %v1490
    %v1492 = vpop.f32.mrf.mxu0
    %v1493 = vadd.f32 %v798, %v1492
    %1494 = vdwg.mxu0
    %1495 = vmatpush.bf16.msra.mxu0 %v1250
    %1496 = vmatpush.bf16.msra.mxu0 %v1246
    %1497 = vmatpush.bf16.msra.mxu0 %v1242
    %1498 = vmatpush.bf16.msra.mxu0 %v1238
    %1499 = vmatpush.bf16.msra.mxu0 %v1234
    %1500 = vmatpush.bf16.msra.mxu0 %v1230
    %1501 = vmatpush.bf16.msra.mxu0 %v1226
    %1502 = vmatpush.bf16.msra.mxu0 %v1222
    %1503 = vmatmul.bf16.gmra.mxu0 %v637
    %v1504 = vpop.f32.mrf.mxu0
    %v1505 = vadd.f32 %v1456, %v1504
    %v1506 = vpop.f32.mrf.mxu0
    %v1507 = vadd.f32 %v1458, %v1506
    %1508 = vmatmul.bf16.gmra.mxu0 %v641
    %v1509 = vpop.f32.mrf.mxu0
    %v1510 = vadd.f32 %v1461, %v1509
    %v1511 = vpop.f32.mrf.mxu0
    %v1512 = vadd.f32 %v1463, %v1511
    %1513 = vmatmul.bf16.gmra.mxu0 %v645
    %v1514 = vpop.f32.mrf.mxu0
    %v1515 = vadd.f32 %v1466, %v1514
    %v1516 = vpop.f32.mrf.mxu0
    %v1517 = vadd.f32 %v1468, %v1516
    %1518 = vmatmul.bf16.gmra.mxu0 %v649
    %v1519 = vpop.f32.mrf.mxu0
    %v1520 = vadd.f32 %v1471, %v1519
    %v1521 = vpop.f32.mrf.mxu0
    %v1522 = vadd.f32 %v1473, %v1521
    %1523 = vmatmul.bf16.gmra.mxu0 %v653
    %v1524 = vpop.f32.mrf.mxu0
    %v1525 = vadd.f32 %v1476, %v1524
    %v1526 = vpop.f32.mrf.mxu0
    %v1527 = vadd.f32 %v1478, %v1526
    %1528 = vmatmul.bf16.gmra.mxu0 %v657
    %v1529 = vpop.f32.mrf.mxu0
    %v1530 = vadd.f32 %v1481, %v1529
    %v1531 = vpop.f32.mrf.mxu0
    %v1532 = vadd.f32 %v1483, %v1531
    %1533 = vmatmul.bf16.gmra.mxu0 %v661
    %v1534 = vpop.f32.mrf.mxu0
    %v1535 = vadd.f32 %v1486, %v1534
    %v1536 = vpop.f32.mrf.mxu0
    %v1537 = vadd.f32 %v1488, %v1536
    %1538 = vmatmul.bf16.gmra.mxu0 %v665
    %v1539 = vpop.f32.mrf.mxu0
    %v1540 = vadd.f32 %v1491, %v1539
    %v1541 = vpop.f32.mrf.mxu0
    %v1542 = vadd.f32 %v1493, %v1541
    %1543 = vdwg.mxu0
    %1544 = vmatpush.bf16.msra.mxu0 %v1282
    %1545 = vmatpush.bf16.msra.mxu0 %v1278
    %1546 = vmatpush.bf16.msra.mxu0 %v1274
    %1547 = vmatpush.bf16.msra.mxu0 %v1270
    %1548 = vmatpush.bf16.msra.mxu0 %v1266
    %1549 = vmatpush.bf16.msra.mxu0 %v1262
    %1550 = vmatpush.bf16.msra.mxu0 %v1258
    %1551 = vmatpush.bf16.msra.mxu0 %v1254
    %1552 = vmatmul.bf16.gmra.mxu0 %v638
    %v1553 = vpop.f32.mrf.mxu0
    %v1554 = vadd.f32 %v1505, %v1553
    %v1555 = vpop.f32.mrf.mxu0
    %v1556 = vadd.f32 %v1507, %v1555
    %1557 = vmatmul.bf16.gmra.mxu0 %v642
    %v1558 = vpop.f32.mrf.mxu0
    %v1559 = vadd.f32 %v1510, %v1558
    %v1560 = vpop.f32.mrf.mxu0
    %v1561 = vadd.f32 %v1512, %v1560
    %1562 = vmatmul.bf16.gmra.mxu0 %v646
    %v1563 = vpop.f32.mrf.mxu0
    %v1564 = vadd.f32 %v1515, %v1563
    %v1565 = vpop.f32.mrf.mxu0
    %v1566 = vadd.f32 %v1517, %v1565
    %1567 = vmatmul.bf16.gmra.mxu0 %v650
    %v1568 = vpop.f32.mrf.mxu0
    %v1569 = vadd.f32 %v1520, %v1568
    %v1570 = vpop.f32.mrf.mxu0
    %v1571 = vadd.f32 %v1522, %v1570
    %1572 = vmatmul.bf16.gmra.mxu0 %v654
    %v1573 = vpop.f32.mrf.mxu0
    %v1574 = vadd.f32 %v1525, %v1573
    %v1575 = vpop.f32.mrf.mxu0
    %v1576 = vadd.f32 %v1527, %v1575
    %1577 = vmatmul.bf16.gmra.mxu0 %v658
    %v1578 = vpop.f32.mrf.mxu0
    %v1579 = vadd.f32 %v1530, %v1578
    %v1580 = vpop.f32.mrf.mxu0
    %v1581 = vadd.f32 %v1532, %v1580
    %1582 = vmatmul.bf16.gmra.mxu0 %v662
    %v1583 = vpop.f32.mrf.mxu0
    %v1584 = vadd.f32 %v1535, %v1583
    %v1585 = vpop.f32.mrf.mxu0
    %v1586 = vadd.f32 %v1537, %v1585
    %1587 = vmatmul.bf16.gmra.mxu0 %v666
    %v1588 = vpop.f32.mrf.mxu0
    %v1589 = vadd.f32 %v1540, %v1588
    %v1590 = vpop.f32.mrf.mxu0
    %v1591 = vadd.f32 %v1542, %v1590
    %1592 = vdwg.mxu0
    %1593 = vmatpush.bf16.msra.mxu0 %v1314
    %1594 = vmatpush.bf16.msra.mxu0 %v1310
    %1595 = vmatpush.bf16.msra.mxu0 %v1306
    %1596 = vmatpush.bf16.msra.mxu0 %v1302
    %1597 = vmatpush.bf16.msra.mxu0 %v1298
    %1598 = vmatpush.bf16.msra.mxu0 %v1294
    %1599 = vmatpush.bf16.msra.mxu0 %v1290
    %1600 = vmatpush.bf16.msra.mxu0 %v1286
    %1601 = vmatmul.bf16.gmra.mxu0 %v639
    %v1602 = vpop.f32.mrf.mxu0
    %v1603 = vadd.f32 %v1554, %v1602
    %v1604 = vpop.f32.mrf.mxu0
    %v1605 = vadd.f32 %v1556, %v1604
    %1606 = vmatmul.bf16.gmra.mxu0 %v643
    %v1607 = vpop.f32.mrf.mxu0
    %v1608 = vadd.f32 %v1559, %v1607
    %v1609 = vpop.f32.mrf.mxu0
    %v1610 = vadd.f32 %v1561, %v1609
    %1611 = vmatmul.bf16.gmra.mxu0 %v647
    %v1612 = vpop.f32.mrf.mxu0
    %v1613 = vadd.f32 %v1564, %v1612
    %v1614 = vpop.f32.mrf.mxu0
    %v1615 = vadd.f32 %v1566, %v1614
    %1616 = vmatmul.bf16.gmra.mxu0 %v651
    %v1617 = vpop.f32.mrf.mxu0
    %v1618 = vadd.f32 %v1569, %v1617
    %v1619 = vpop.f32.mrf.mxu0
    %v1620 = vadd.f32 %v1571, %v1619
    %1621 = vmatmul.bf16.gmra.mxu0 %v655
    %v1622 = vpop.f32.mrf.mxu0
    %v1623 = vadd.f32 %v1574, %v1622
    %v1624 = vpop.f32.mrf.mxu0
    %v1625 = vadd.f32 %v1576, %v1624
    %1626 = vmatmul.bf16.gmra.mxu0 %v659
    %v1627 = vpop.f32.mrf.mxu0
    %v1628 = vadd.f32 %v1579, %v1627
    %v1629 = vpop.f32.mrf.mxu0
    %v1630 = vadd.f32 %v1581, %v1629
    %1631 = vmatmul.bf16.gmra.mxu0 %v663
    %v1632 = vpop.f32.mrf.mxu0
    %v1633 = vadd.f32 %v1584, %v1632
    %v1634 = vpop.f32.mrf.mxu0
    %v1635 = vadd.f32 %v1586, %v1634
    %1636 = vmatmul.bf16.gmra.mxu0 %v667
    %v1637 = vpop.f32.mrf.mxu0
    %v1638 = vadd.f32 %v1589, %v1637
    %v1639 = vpop.f32.mrf.mxu0
    %v1640 = vadd.f32 %v1591, %v1639
    %1641 = vdwg.mxu0
    %1642 = vmatpush.bf16.msra.mxu0 %v1219
    %1643 = vmatpush.bf16.msra.mxu0 %v1215
    %1644 = vmatpush.bf16.msra.mxu0 %v1211
    %1645 = vmatpush.bf16.msra.mxu0 %v1207
    %1646 = vmatpush.bf16.msra.mxu0 %v1203
    %1647 = vmatpush.bf16.msra.mxu0 %v1199
    %1648 = vmatpush.bf16.msra.mxu0 %v1195
    %1649 = vmatpush.bf16.msra.mxu0 %v1191
    %1650 = vmatmul.bf16.gmra.mxu0 %v636
    %v1651 = vpop.f32.mrf.mxu0
    %v1652 = vadd.f32 %v799, %v1651
    %v1653 = vpop.f32.mrf.mxu0
    %v1654 = vadd.f32 %v799, %v1653
    %1655 = vmatmul.bf16.gmra.mxu0 %v640
    %v1656 = vpop.f32.mrf.mxu0
    %v1657 = vadd.f32 %v799, %v1656
    %v1658 = vpop.f32.mrf.mxu0
    %v1659 = vadd.f32 %v799, %v1658
    %1660 = vmatmul.bf16.gmra.mxu0 %v644
    %v1661 = vpop.f32.mrf.mxu0
    %v1662 = vadd.f32 %v799, %v1661
    %v1663 = vpop.f32.mrf.mxu0
    %v1664 = vadd.f32 %v799, %v1663
    %1665 = vmatmul.bf16.gmra.mxu0 %v648
    %v1666 = vpop.f32.mrf.mxu0
    %v1667 = vadd.f32 %v799, %v1666
    %v1668 = vpop.f32.mrf.mxu0
    %v1669 = vadd.f32 %v799, %v1668
    %1670 = vmatmul.bf16.gmra.mxu0 %v652
    %v1671 = vpop.f32.mrf.mxu0
    %v1672 = vadd.f32 %v799, %v1671
    %v1673 = vpop.f32.mrf.mxu0
    %v1674 = vadd.f32 %v799, %v1673
    %1675 = vmatmul.bf16.gmra.mxu0 %v656
    %v1676 = vpop.f32.mrf.mxu0
    %v1677 = vadd.f32 %v799, %v1676
    %v1678 = vpop.f32.mrf.mxu0
    %v1679 = vadd.f32 %v799, %v1678
    %1680 = vmatmul.bf16.gmra.mxu0 %v660
    %v1681 = vpop.f32.mrf.mxu0
    %v1682 = vadd.f32 %v799, %v1681
    %v1683 = vpop.f32.mrf.mxu0
    %v1684 = vadd.f32 %v799, %v1683
    %1685 = vmatmul.bf16.gmra.mxu0 %v664
    %v1686 = vpop.f32.mrf.mxu0
    %v1687 = vadd.f32 %v799, %v1686
    %v1688 = vpop.f32.mrf.mxu0
    %v1689 = vadd.f32 %v799, %v1688
    %1690 = vdwg.mxu0
    %1691 = vmatpush.bf16.msra.mxu0 %v1251
    %1692 = vmatpush.bf16.msra.mxu0 %v1247
    %1693 = vmatpush.bf16.msra.mxu0 %v1243
    %1694 = vmatpush.bf16.msra.mxu0 %v1239
    %1695 = vmatpush.bf16.msra.mxu0 %v1235
    %1696 = vmatpush.bf16.msra.mxu0 %v1231
    %1697 = vmatpush.bf16.msra.mxu0 %v1227
    %1698 = vmatpush.bf16.msra.mxu0 %v1223
    %1699 = vmatmul.bf16.gmra.mxu0 %v637
    %v1700 = vpop.f32.mrf.mxu0
    %v1701 = vadd.f32 %v1652, %v1700
    %v1702 = vpop.f32.mrf.mxu0
    %v1703 = vadd.f32 %v1654, %v1702
    %1704 = vmatmul.bf16.gmra.mxu0 %v641
    %v1705 = vpop.f32.mrf.mxu0
    %v1706 = vadd.f32 %v1657, %v1705
    %v1707 = vpop.f32.mrf.mxu0
    %v1708 = vadd.f32 %v1659, %v1707
    %1709 = vmatmul.bf16.gmra.mxu0 %v645
    %v1710 = vpop.f32.mrf.mxu0
    %v1711 = vadd.f32 %v1662, %v1710
    %v1712 = vpop.f32.mrf.mxu0
    %v1713 = vadd.f32 %v1664, %v1712
    %1714 = vmatmul.bf16.gmra.mxu0 %v649
    %v1715 = vpop.f32.mrf.mxu0
    %v1716 = vadd.f32 %v1667, %v1715
    %v1717 = vpop.f32.mrf.mxu0
    %v1718 = vadd.f32 %v1669, %v1717
    %1719 = vmatmul.bf16.gmra.mxu0 %v653
    %v1720 = vpop.f32.mrf.mxu0
    %v1721 = vadd.f32 %v1672, %v1720
    %v1722 = vpop.f32.mrf.mxu0
    %v1723 = vadd.f32 %v1674, %v1722
    %1724 = vmatmul.bf16.gmra.mxu0 %v657
    %v1725 = vpop.f32.mrf.mxu0
    %v1726 = vadd.f32 %v1677, %v1725
    %v1727 = vpop.f32.mrf.mxu0
    %v1728 = vadd.f32 %v1679, %v1727
    %1729 = vmatmul.bf16.gmra.mxu0 %v661
    %v1730 = vpop.f32.mrf.mxu0
    %v1731 = vadd.f32 %v1682, %v1730
    %v1732 = vpop.f32.mrf.mxu0
    %v1733 = vadd.f32 %v1684, %v1732
    %1734 = vmatmul.bf16.gmra.mxu0 %v665
    %v1735 = vpop.f32.mrf.mxu0
    %v1736 = vadd.f32 %v1687, %v1735
    %v1737 = vpop.f32.mrf.mxu0
    %v1738 = vadd.f32 %v1689, %v1737
    %1739 = vdwg.mxu0
    %1740 = vmatpush.bf16.msra.mxu0 %v1283
    %1741 = vmatpush.bf16.msra.mxu0 %v1279
    %1742 = vmatpush.bf16.msra.mxu0 %v1275
    %1743 = vmatpush.bf16.msra.mxu0 %v1271
    %1744 = vmatpush.bf16.msra.mxu0 %v1267
    %1745 = vmatpush.bf16.msra.mxu0 %v1263
    %1746 = vmatpush.bf16.msra.mxu0 %v1259
    %1747 = vmatpush.bf16.msra.mxu0 %v1255
    %1748 = vmatmul.bf16.gmra.mxu0 %v638
    %v1749 = vpop.f32.mrf.mxu0
    %v1750 = vadd.f32 %v1701, %v1749
    %v1751 = vpop.f32.mrf.mxu0
    %v1752 = vadd.f32 %v1703, %v1751
    %1753 = vmatmul.bf16.gmra.mxu0 %v642
    %v1754 = vpop.f32.mrf.mxu0
    %v1755 = vadd.f32 %v1706, %v1754
    %v1756 = vpop.f32.mrf.mxu0
    %v1757 = vadd.f32 %v1708, %v1756
    %1758 = vmatmul.bf16.gmra.mxu0 %v646
    %v1759 = vpop.f32.mrf.mxu0
    %v1760 = vadd.f32 %v1711, %v1759
    %v1761 = vpop.f32.mrf.mxu0
    %v1762 = vadd.f32 %v1713, %v1761
    %1763 = vmatmul.bf16.gmra.mxu0 %v650
    %v1764 = vpop.f32.mrf.mxu0
    %v1765 = vadd.f32 %v1716, %v1764
    %v1766 = vpop.f32.mrf.mxu0
    %v1767 = vadd.f32 %v1718, %v1766
    %1768 = vmatmul.bf16.gmra.mxu0 %v654
    %v1769 = vpop.f32.mrf.mxu0
    %v1770 = vadd.f32 %v1721, %v1769
    %v1771 = vpop.f32.mrf.mxu0
    %v1772 = vadd.f32 %v1723, %v1771
    %1773 = vmatmul.bf16.gmra.mxu0 %v658
    %v1774 = vpop.f32.mrf.mxu0
    %v1775 = vadd.f32 %v1726, %v1774
    %v1776 = vpop.f32.mrf.mxu0
    %v1777 = vadd.f32 %v1728, %v1776
    %1778 = vmatmul.bf16.gmra.mxu0 %v662
    %v1779 = vpop.f32.mrf.mxu0
    %v1780 = vadd.f32 %v1731, %v1779
    %v1781 = vpop.f32.mrf.mxu0
    %v1782 = vadd.f32 %v1733, %v1781
    %1783 = vmatmul.bf16.gmra.mxu0 %v666
    %v1784 = vpop.f32.mrf.mxu0
    %v1785 = vadd.f32 %v1736, %v1784
    %v1786 = vpop.f32.mrf.mxu0
    %v1787 = vadd.f32 %v1738, %v1786
    %1788 = vdwg.mxu0
    %1789 = vmatpush.bf16.msra.mxu0 %v1315
    %1790 = vmatpush.bf16.msra.mxu0 %v1311
    %1791 = vmatpush.bf16.msra.mxu0 %v1307
    %1792 = vmatpush.bf16.msra.mxu0 %v1303
    %1793 = vmatpush.bf16.msra.mxu0 %v1299
    %1794 = vmatpush.bf16.msra.mxu0 %v1295
    %1795 = vmatpush.bf16.msra.mxu0 %v1291
    %1796 = vmatpush.bf16.msra.mxu0 %v1287
    %1797 = vmatmul.bf16.gmra.mxu0 %v639
    %v1798 = vpop.f32.mrf.mxu0
    %v1799 = vadd.f32 %v1750, %v1798
    %v1800 = vpop.f32.mrf.mxu0
    %v1801 = vadd.f32 %v1752, %v1800
    %1802 = vmatmul.bf16.gmra.mxu0 %v643
    %v1803 = vpop.f32.mrf.mxu0
    %v1804 = vadd.f32 %v1755, %v1803
    %v1805 = vpop.f32.mrf.mxu0
    %v1806 = vadd.f32 %v1757, %v1805
    %1807 = vmatmul.bf16.gmra.mxu0 %v647
    %v1808 = vpop.f32.mrf.mxu0
    %v1809 = vadd.f32 %v1760, %v1808
    %v1810 = vpop.f32.mrf.mxu0
    %v1811 = vadd.f32 %v1762, %v1810
    %1812 = vmatmul.bf16.gmra.mxu0 %v651
    %v1813 = vpop.f32.mrf.mxu0
    %v1814 = vadd.f32 %v1765, %v1813
    %v1815 = vpop.f32.mrf.mxu0
    %v1816 = vadd.f32 %v1767, %v1815
    %1817 = vmatmul.bf16.gmra.mxu0 %v655
    %v1818 = vpop.f32.mrf.mxu0
    %v1819 = vadd.f32 %v1770, %v1818
    %v1820 = vpop.f32.mrf.mxu0
    %v1821 = vadd.f32 %v1772, %v1820
    %1822 = vmatmul.bf16.gmra.mxu0 %v659
    %v1823 = vpop.f32.mrf.mxu0
    %v1824 = vadd.f32 %v1775, %v1823
    %v1825 = vpop.f32.mrf.mxu0
    %v1826 = vadd.f32 %v1777, %v1825
    %1827 = vmatmul.bf16.gmra.mxu0 %v663
    %v1828 = vpop.f32.mrf.mxu0
    %v1829 = vadd.f32 %v1780, %v1828
    %v1830 = vpop.f32.mrf.mxu0
    %v1831 = vadd.f32 %v1782, %v1830
    %1832 = vmatmul.bf16.gmra.mxu0 %v667
    %v1833 = vpop.f32.mrf.mxu0
    %v1834 = vadd.f32 %v1785, %v1833
    %v1835 = vpop.f32.mrf.mxu0
    %v1836 = vadd.f32 %v1787, %v1835
    %1837 = vdwg.mxu0
    %1838 = vmatpush.bf16.msra.mxu0 %v1220
    %1839 = vmatpush.bf16.msra.mxu0 %v1216
    %1840 = vmatpush.bf16.msra.mxu0 %v1212
    %1841 = vmatpush.bf16.msra.mxu0 %v1208
    %1842 = vmatpush.bf16.msra.mxu0 %v1204
    %1843 = vmatpush.bf16.msra.mxu0 %v1200
    %1844 = vmatpush.bf16.msra.mxu0 %v1196
    %1845 = vmatpush.bf16.msra.mxu0 %v1192
    %1846 = vmatmul.bf16.gmra.mxu0 %v636
    %v1847 = vpop.f32.mrf.mxu0
    %v1848 = vadd.f32 %v800, %v1847
    %v1849 = vpop.f32.mrf.mxu0
    %v1850 = vadd.f32 %v800, %v1849
    %1851 = vmatmul.bf16.gmra.mxu0 %v640
    %v1852 = vpop.f32.mrf.mxu0
    %v1853 = vadd.f32 %v800, %v1852
    %v1854 = vpop.f32.mrf.mxu0
    %v1855 = vadd.f32 %v800, %v1854
    %1856 = vmatmul.bf16.gmra.mxu0 %v644
    %v1857 = vpop.f32.mrf.mxu0
    %v1858 = vadd.f32 %v800, %v1857
    %v1859 = vpop.f32.mrf.mxu0
    %v1860 = vadd.f32 %v800, %v1859
    %1861 = vmatmul.bf16.gmra.mxu0 %v648
    %v1862 = vpop.f32.mrf.mxu0
    %v1863 = vadd.f32 %v800, %v1862
    %v1864 = vpop.f32.mrf.mxu0
    %v1865 = vadd.f32 %v800, %v1864
    %1866 = vmatmul.bf16.gmra.mxu0 %v652
    %v1867 = vpop.f32.mrf.mxu0
    %v1868 = vadd.f32 %v800, %v1867
    %v1869 = vpop.f32.mrf.mxu0
    %v1870 = vadd.f32 %v800, %v1869
    %1871 = vmatmul.bf16.gmra.mxu0 %v656
    %v1872 = vpop.f32.mrf.mxu0
    %v1873 = vadd.f32 %v800, %v1872
    %v1874 = vpop.f32.mrf.mxu0
    %v1875 = vadd.f32 %v800, %v1874
    %1876 = vmatmul.bf16.gmra.mxu0 %v660
    %v1877 = vpop.f32.mrf.mxu0
    %v1878 = vadd.f32 %v800, %v1877
    %v1879 = vpop.f32.mrf.mxu0
    %v1880 = vadd.f32 %v800, %v1879
    %1881 = vmatmul.bf16.gmra.mxu0 %v664
    %v1882 = vpop.f32.mrf.mxu0
    %v1883 = vadd.f32 %v800, %v1882
    %v1884 = vpop.f32.mrf.mxu0
    %v1885 = vadd.f32 %v800, %v1884
    %1886 = vdwg.mxu0
    %1887 = vmatpush.bf16.msra.mxu0 %v1252
    %1888 = vmatpush.bf16.msra.mxu0 %v1248
    %1889 = vmatpush.bf16.msra.mxu0 %v1244
    %1890 = vmatpush.bf16.msra.mxu0 %v1240
    %1891 = vmatpush.bf16.msra.mxu0 %v1236
    %1892 = vmatpush.bf16.msra.mxu0 %v1232
    %1893 = vmatpush.bf16.msra.mxu0 %v1228
    %1894 = vmatpush.bf16.msra.mxu0 %v1224
    %1895 = vmatmul.bf16.gmra.mxu0 %v637
    %v1896 = vpop.f32.mrf.mxu0
    %v1897 = vadd.f32 %v1848, %v1896
    %v1898 = vpop.f32.mrf.mxu0
    %v1899 = vadd.f32 %v1850, %v1898
    %1900 = vmatmul.bf16.gmra.mxu0 %v641
    %v1901 = vpop.f32.mrf.mxu0
    %v1902 = vadd.f32 %v1853, %v1901
    %v1903 = vpop.f32.mrf.mxu0
    %v1904 = vadd.f32 %v1855, %v1903
    %1905 = vmatmul.bf16.gmra.mxu0 %v645
    %v1906 = vpop.f32.mrf.mxu0
    %v1907 = vadd.f32 %v1858, %v1906
    %v1908 = vpop.f32.mrf.mxu0
    %v1909 = vadd.f32 %v1860, %v1908
    %1910 = vmatmul.bf16.gmra.mxu0 %v649
    %v1911 = vpop.f32.mrf.mxu0
    %v1912 = vadd.f32 %v1863, %v1911
    %v1913 = vpop.f32.mrf.mxu0
    %v1914 = vadd.f32 %v1865, %v1913
    %1915 = vmatmul.bf16.gmra.mxu0 %v653
    %v1916 = vpop.f32.mrf.mxu0
    %v1917 = vadd.f32 %v1868, %v1916
    %v1918 = vpop.f32.mrf.mxu0
    %v1919 = vadd.f32 %v1870, %v1918
    %1920 = vmatmul.bf16.gmra.mxu0 %v657
    %v1921 = vpop.f32.mrf.mxu0
    %v1922 = vadd.f32 %v1873, %v1921
    %v1923 = vpop.f32.mrf.mxu0
    %v1924 = vadd.f32 %v1875, %v1923
    %1925 = vmatmul.bf16.gmra.mxu0 %v661
    %v1926 = vpop.f32.mrf.mxu0
    %v1927 = vadd.f32 %v1878, %v1926
    %v1928 = vpop.f32.mrf.mxu0
    %v1929 = vadd.f32 %v1880, %v1928
    %1930 = vmatmul.bf16.gmra.mxu0 %v665
    %v1931 = vpop.f32.mrf.mxu0
    %v1932 = vadd.f32 %v1883, %v1931
    %v1933 = vpop.f32.mrf.mxu0
    %v1934 = vadd.f32 %v1885, %v1933
    %1935 = vdwg.mxu0
    %1936 = vmatpush.bf16.msra.mxu0 %v1284
    %1937 = vmatpush.bf16.msra.mxu0 %v1280
    %1938 = vmatpush.bf16.msra.mxu0 %v1276
    %1939 = vmatpush.bf16.msra.mxu0 %v1272
    %1940 = vmatpush.bf16.msra.mxu0 %v1268
    %1941 = vmatpush.bf16.msra.mxu0 %v1264
    %1942 = vmatpush.bf16.msra.mxu0 %v1260
    %1943 = vmatpush.bf16.msra.mxu0 %v1256
    %1944 = vmatmul.bf16.gmra.mxu0 %v638
    %v1945 = vpop.f32.mrf.mxu0
    %v1946 = vadd.f32 %v1897, %v1945
    %v1947 = vpop.f32.mrf.mxu0
    %v1948 = vadd.f32 %v1899, %v1947
    %1949 = vmatmul.bf16.gmra.mxu0 %v642
    %v1950 = vpop.f32.mrf.mxu0
    %v1951 = vadd.f32 %v1902, %v1950
    %v1952 = vpop.f32.mrf.mxu0
    %v1953 = vadd.f32 %v1904, %v1952
    %1954 = vmatmul.bf16.gmra.mxu0 %v646
    %v1955 = vpop.f32.mrf.mxu0
    %v1956 = vadd.f32 %v1907, %v1955
    %v1957 = vpop.f32.mrf.mxu0
    %v1958 = vadd.f32 %v1909, %v1957
    %1959 = vmatmul.bf16.gmra.mxu0 %v650
    %v1960 = vpop.f32.mrf.mxu0
    %v1961 = vadd.f32 %v1912, %v1960
    %v1962 = vpop.f32.mrf.mxu0
    %v1963 = vadd.f32 %v1914, %v1962
    %1964 = vmatmul.bf16.gmra.mxu0 %v654
    %v1965 = vpop.f32.mrf.mxu0
    %v1966 = vadd.f32 %v1917, %v1965
    %v1967 = vpop.f32.mrf.mxu0
    %v1968 = vadd.f32 %v1919, %v1967
    %1969 = vmatmul.bf16.gmra.mxu0 %v658
    %v1970 = vpop.f32.mrf.mxu0
    %v1971 = vadd.f32 %v1922, %v1970
    %v1972 = vpop.f32.mrf.mxu0
    %v1973 = vadd.f32 %v1924, %v1972
    %1974 = vmatmul.bf16.gmra.mxu0 %v662
    %v1975 = vpop.f32.mrf.mxu0
    %v1976 = vadd.f32 %v1927, %v1975
    %v1977 = vpop.f32.mrf.mxu0
    %v1978 = vadd.f32 %v1929, %v1977
    %1979 = vmatmul.bf16.gmra.mxu0 %v666
    %v1980 = vpop.f32.mrf.mxu0
    %v1981 = vadd.f32 %v1932, %v1980
    %v1982 = vpop.f32.mrf.mxu0
    %v1983 = vadd.f32 %v1934, %v1982
    %1984 = vdwg.mxu0
    %1985 = vmatpush.bf16.msra.mxu0 %v1316
    %1986 = vmatpush.bf16.msra.mxu0 %v1312
    %1987 = vmatpush.bf16.msra.mxu0 %v1308
    %1988 = vmatpush.bf16.msra.mxu0 %v1304
    %1989 = vmatpush.bf16.msra.mxu0 %v1300
    %1990 = vmatpush.bf16.msra.mxu0 %v1296
    %1991 = vmatpush.bf16.msra.mxu0 %v1292
    %1992 = vmatpush.bf16.msra.mxu0 %v1288
    %1993 = vmatmul.bf16.gmra.mxu0 %v639
    %v1994 = vpop.f32.mrf.mxu0
    %v1995 = vadd.f32 %v1946, %v1994
    %v1996 = vpop.f32.mrf.mxu0
    %v1997 = vadd.f32 %v1948, %v1996
    %1998 = vmatmul.bf16.gmra.mxu0 %v643
    %v1999 = vpop.f32.mrf.mxu0
    %v2000 = vadd.f32 %v1951, %v1999
    %v2001 = vpop.f32.mrf.mxu0
    %v2002 = vadd.f32 %v1953, %v2001
    %2003 = vmatmul.bf16.gmra.mxu0 %v647
    %v2004 = vpop.f32.mrf.mxu0
    %v2005 = vadd.f32 %v1956, %v2004
    %v2006 = vpop.f32.mrf.mxu0
    %v2007 = vadd.f32 %v1958, %v2006
    %2008 = vmatmul.bf16.gmra.mxu0 %v651
    %v2009 = vpop.f32.mrf.mxu0
    %v2010 = vadd.f32 %v1961, %v2009
    %v2011 = vpop.f32.mrf.mxu0
    %v2012 = vadd.f32 %v1963, %v2011
    %2013 = vmatmul.bf16.gmra.mxu0 %v655
    %v2014 = vpop.f32.mrf.mxu0
    %v2015 = vadd.f32 %v1966, %v2014
    %v2016 = vpop.f32.mrf.mxu0
    %v2017 = vadd.f32 %v1968, %v2016
    %2018 = vmatmul.bf16.gmra.mxu0 %v659
    %v2019 = vpop.f32.mrf.mxu0
    %v2020 = vadd.f32 %v1971, %v2019
    %v2021 = vpop.f32.mrf.mxu0
    %v2022 = vadd.f32 %v1973, %v2021
    %2023 = vmatmul.bf16.gmra.mxu0 %v663
    %v2024 = vpop.f32.mrf.mxu0
    %v2025 = vadd.f32 %v1976, %v2024
    %v2026 = vpop.f32.mrf.mxu0
    %v2027 = vadd.f32 %v1978, %v2026
    %2028 = vmatmul.bf16.gmra.mxu0 %v667
    %v2029 = vpop.f32.mrf.mxu0
    %v2030 = vadd.f32 %v1981, %v2029
    %v2031 = vpop.f32.mrf.mxu0
    %v2032 = vadd.f32 %v1983, %v2031
    %2033 = vdwg.mxu0
    %2034 = vmatpush.bf16.msra.mxu0 %v1221
    %2035 = vmatpush.bf16.msra.mxu0 %v1217
    %2036 = vmatpush.bf16.msra.mxu0 %v1213
    %2037 = vmatpush.bf16.msra.mxu0 %v1209
    %2038 = vmatpush.bf16.msra.mxu0 %v1205
    %2039 = vmatpush.bf16.msra.mxu0 %v1201
    %2040 = vmatpush.bf16.msra.mxu0 %v1197
    %2041 = vmatpush.bf16.msra.mxu0 %v1193
    %2042 = vmatmul.bf16.gmra.mxu0 %v636
    %v2043 = vpop.f32.mrf.mxu0
    %v2044 = vadd.f32 %v801, %v2043
    %v2045 = vpop.f32.mrf.mxu0
    %v2046 = vadd.f32 %v801, %v2045
    %2047 = vmatmul.bf16.gmra.mxu0 %v640
    %v2048 = vpop.f32.mrf.mxu0
    %v2049 = vadd.f32 %v801, %v2048
    %v2050 = vpop.f32.mrf.mxu0
    %v2051 = vadd.f32 %v801, %v2050
    %2052 = vmatmul.bf16.gmra.mxu0 %v644
    %v2053 = vpop.f32.mrf.mxu0
    %v2054 = vadd.f32 %v801, %v2053
    %v2055 = vpop.f32.mrf.mxu0
    %v2056 = vadd.f32 %v801, %v2055
    %2057 = vmatmul.bf16.gmra.mxu0 %v648
    %v2058 = vpop.f32.mrf.mxu0
    %v2059 = vadd.f32 %v801, %v2058
    %v2060 = vpop.f32.mrf.mxu0
    %v2061 = vadd.f32 %v801, %v2060
    %2062 = vmatmul.bf16.gmra.mxu0 %v652
    %v2063 = vpop.f32.mrf.mxu0
    %v2064 = vadd.f32 %v801, %v2063
    %v2065 = vpop.f32.mrf.mxu0
    %v2066 = vadd.f32 %v801, %v2065
    %2067 = vmatmul.bf16.gmra.mxu0 %v656
    %v2068 = vpop.f32.mrf.mxu0
    %v2069 = vadd.f32 %v801, %v2068
    %v2070 = vpop.f32.mrf.mxu0
    %v2071 = vadd.f32 %v801, %v2070
    %2072 = vmatmul.bf16.gmra.mxu0 %v660
    %v2073 = vpop.f32.mrf.mxu0
    %v2074 = vadd.f32 %v801, %v2073
    %v2075 = vpop.f32.mrf.mxu0
    %v2076 = vadd.f32 %v801, %v2075
    %2077 = vmatmul.bf16.gmra.mxu0 %v664
    %v2078 = vpop.f32.mrf.mxu0
    %v2079 = vadd.f32 %v801, %v2078
    %v2080 = vpop.f32.mrf.mxu0
    %v2081 = vadd.f32 %v801, %v2080
    %2082 = vdwg.mxu0
    %2083 = vmatpush.bf16.msra.mxu0 %v1253
    %2084 = vmatpush.bf16.msra.mxu0 %v1249
    %2085 = vmatpush.bf16.msra.mxu0 %v1245
    %2086 = vmatpush.bf16.msra.mxu0 %v1241
    %2087 = vmatpush.bf16.msra.mxu0 %v1237
    %2088 = vmatpush.bf16.msra.mxu0 %v1233
    %2089 = vmatpush.bf16.msra.mxu0 %v1229
    %2090 = vmatpush.bf16.msra.mxu0 %v1225
    %2091 = vmatmul.bf16.gmra.mxu0 %v637
    %v2092 = vpop.f32.mrf.mxu0
    %v2093 = vadd.f32 %v2044, %v2092
    %v2094 = vpop.f32.mrf.mxu0
    %v2095 = vadd.f32 %v2046, %v2094
    %2096 = vmatmul.bf16.gmra.mxu0 %v641
    %v2097 = vpop.f32.mrf.mxu0
    %v2098 = vadd.f32 %v2049, %v2097
    %v2099 = vpop.f32.mrf.mxu0
    %v2100 = vadd.f32 %v2051, %v2099
    %2101 = vmatmul.bf16.gmra.mxu0 %v645
    %v2102 = vpop.f32.mrf.mxu0
    %v2103 = vadd.f32 %v2054, %v2102
    %v2104 = vpop.f32.mrf.mxu0
    %v2105 = vadd.f32 %v2056, %v2104
    %2106 = vmatmul.bf16.gmra.mxu0 %v649
    %v2107 = vpop.f32.mrf.mxu0
    %v2108 = vadd.f32 %v2059, %v2107
    %v2109 = vpop.f32.mrf.mxu0
    %v2110 = vadd.f32 %v2061, %v2109
    %2111 = vmatmul.bf16.gmra.mxu0 %v653
    %v2112 = vpop.f32.mrf.mxu0
    %v2113 = vadd.f32 %v2064, %v2112
    %v2114 = vpop.f32.mrf.mxu0
    %v2115 = vadd.f32 %v2066, %v2114
    %2116 = vmatmul.bf16.gmra.mxu0 %v657
    %v2117 = vpop.f32.mrf.mxu0
    %v2118 = vadd.f32 %v2069, %v2117
    %v2119 = vpop.f32.mrf.mxu0
    %v2120 = vadd.f32 %v2071, %v2119
    %2121 = vmatmul.bf16.gmra.mxu0 %v661
    %v2122 = vpop.f32.mrf.mxu0
    %v2123 = vadd.f32 %v2074, %v2122
    %v2124 = vpop.f32.mrf.mxu0
    %v2125 = vadd.f32 %v2076, %v2124
    %2126 = vmatmul.bf16.gmra.mxu0 %v665
    %v2127 = vpop.f32.mrf.mxu0
    %v2128 = vadd.f32 %v2079, %v2127
    %v2129 = vpop.f32.mrf.mxu0
    %v2130 = vadd.f32 %v2081, %v2129
    %2131 = vdwg.mxu0
    %2132 = vmatpush.bf16.msra.mxu0 %v1285
    %2133 = vmatpush.bf16.msra.mxu0 %v1281
    %2134 = vmatpush.bf16.msra.mxu0 %v1277
    %2135 = vmatpush.bf16.msra.mxu0 %v1273
    %2136 = vmatpush.bf16.msra.mxu0 %v1269
    %2137 = vmatpush.bf16.msra.mxu0 %v1265
    %2138 = vmatpush.bf16.msra.mxu0 %v1261
    %2139 = vmatpush.bf16.msra.mxu0 %v1257
    %2140 = vmatmul.bf16.gmra.mxu0 %v638
    %v2141 = vpop.f32.mrf.mxu0
    %v2142 = vadd.f32 %v2093, %v2141
    %v2143 = vpop.f32.mrf.mxu0
    %v2144 = vadd.f32 %v2095, %v2143
    %2145 = vmatmul.bf16.gmra.mxu0 %v642
    %v2146 = vpop.f32.mrf.mxu0
    %v2147 = vadd.f32 %v2098, %v2146
    %v2148 = vpop.f32.mrf.mxu0
    %v2149 = vadd.f32 %v2100, %v2148
    %2150 = vmatmul.bf16.gmra.mxu0 %v646
    %v2151 = vpop.f32.mrf.mxu0
    %v2152 = vadd.f32 %v2103, %v2151
    %v2153 = vpop.f32.mrf.mxu0
    %v2154 = vadd.f32 %v2105, %v2153
    %2155 = vmatmul.bf16.gmra.mxu0 %v650
    %v2156 = vpop.f32.mrf.mxu0
    %v2157 = vadd.f32 %v2108, %v2156
    %v2158 = vpop.f32.mrf.mxu0
    %v2159 = vadd.f32 %v2110, %v2158
    %2160 = vmatmul.bf16.gmra.mxu0 %v654
    %v2161 = vpop.f32.mrf.mxu0
    %v2162 = vadd.f32 %v2113, %v2161
    %v2163 = vpop.f32.mrf.mxu0
    %v2164 = vadd.f32 %v2115, %v2163
    %2165 = vmatmul.bf16.gmra.mxu0 %v658
    %v2166 = vpop.f32.mrf.mxu0
    %v2167 = vadd.f32 %v2118, %v2166
    %v2168 = vpop.f32.mrf.mxu0
    %v2169 = vadd.f32 %v2120, %v2168
    %2170 = vmatmul.bf16.gmra.mxu0 %v662
    %v2171 = vpop.f32.mrf.mxu0
    %v2172 = vadd.f32 %v2123, %v2171
    %v2173 = vpop.f32.mrf.mxu0
    %v2174 = vadd.f32 %v2125, %v2173
    %2175 = vmatmul.bf16.gmra.mxu0 %v666
    %v2176 = vpop.f32.mrf.mxu0
    %v2177 = vadd.f32 %v2128, %v2176
    %v2178 = vpop.f32.mrf.mxu0
    %v2179 = vadd.f32 %v2130, %v2178
    %2180 = vdwg.mxu0
    %2181 = vmatpush.bf16.msra.mxu0 %v1317
    %2182 = vmatpush.bf16.msra.mxu0 %v1313
    %2183 = vmatpush.bf16.msra.mxu0 %v1309
    %2184 = vmatpush.bf16.msra.mxu0 %v1305
    %2185 = vmatpush.bf16.msra.mxu0 %v1301
    %2186 = vmatpush.bf16.msra.mxu0 %v1297
    %2187 = vmatpush.bf16.msra.mxu0 %v1293
    %2188 = vmatpush.bf16.msra.mxu0 %v1289
    %2189 = vmatmul.bf16.gmra.mxu0 %v639
    %v2190 = vpop.f32.mrf.mxu0
    %v2191 = vadd.f32 %v2142, %v2190
    %v2192 = vpop.f32.mrf.mxu0
    %v2193 = vadd.f32 %v2144, %v2192
    %2194 = vmatmul.bf16.gmra.mxu0 %v643
    %v2195 = vpop.f32.mrf.mxu0
    %v2196 = vadd.f32 %v2147, %v2195
    %v2197 = vpop.f32.mrf.mxu0
    %v2198 = vadd.f32 %v2149, %v2197
    %2199 = vmatmul.bf16.gmra.mxu0 %v647
    %v2200 = vpop.f32.mrf.mxu0
    %v2201 = vadd.f32 %v2152, %v2200
    %v2202 = vpop.f32.mrf.mxu0
    %v2203 = vadd.f32 %v2154, %v2202
    %2204 = vmatmul.bf16.gmra.mxu0 %v651
    %v2205 = vpop.f32.mrf.mxu0
    %v2206 = vadd.f32 %v2157, %v2205
    %v2207 = vpop.f32.mrf.mxu0
    %v2208 = vadd.f32 %v2159, %v2207
    %2209 = vmatmul.bf16.gmra.mxu0 %v655
    %v2210 = vpop.f32.mrf.mxu0
    %v2211 = vadd.f32 %v2162, %v2210
    %v2212 = vpop.f32.mrf.mxu0
    %v2213 = vadd.f32 %v2164, %v2212
    %2214 = vmatmul.bf16.gmra.mxu0 %v659
    %v2215 = vpop.f32.mrf.mxu0
    %v2216 = vadd.f32 %v2167, %v2215
    %v2217 = vpop.f32.mrf.mxu0
    %v2218 = vadd.f32 %v2169, %v2217
    %2219 = vmatmul.bf16.gmra.mxu0 %v663
    %v2220 = vpop.f32.mrf.mxu0
    %v2221 = vadd.f32 %v2172, %v2220
    %v2222 = vpop.f32.mrf.mxu0
    %v2223 = vadd.f32 %v2174, %v2222
    %2224 = vmatmul.bf16.gmra.mxu0 %v667
    %v2225 = vpop.f32.mrf.mxu0
    %v2226 = vadd.f32 %v2177, %v2225
    %v2227 = vpop.f32.mrf.mxu0
    %v2228 = vadd.f32 %v2179, %v2227
    %2229 = vdwg.mxu0
    %v2230 = vmax.f32 %v1603, 0.0
    %v2231 = vmax.f32 %v1799, 0.0
    %v2232 = vmax.f32 %v1995, 0.0
    %v2233 = vmax.f32 %v2191, 0.0
    %v2234 = vmax.f32 %v1605, 0.0
    %v2235 = vmax.f32 %v1801, 0.0
    %v2236 = vmax.f32 %v1997, 0.0
    %v2237 = vmax.f32 %v2193, 0.0
    %v2238 = vmax.f32 %v1608, 0.0
    %v2239 = vmax.f32 %v1804, 0.0
    %v2240 = vmax.f32 %v2000, 0.0
    %v2241 = vmax.f32 %v2196, 0.0
    %v2242 = vmax.f32 %v1610, 0.0
    %v2243 = vmax.f32 %v1806, 0.0
    %v2244 = vmax.f32 %v2002, 0.0
    %v2245 = vmax.f32 %v2198, 0.0
    %v2246 = vmax.f32 %v1613, 0.0
    %v2247 = vmax.f32 %v1809, 0.0
    %v2248 = vmax.f32 %v2005, 0.0
    %v2249 = vmax.f32 %v2201, 0.0
    %v2250 = vmax.f32 %v1615, 0.0
    %v2251 = vmax.f32 %v1811, 0.0
    %v2252 = vmax.f32 %v2007, 0.0
    %v2253 = vmax.f32 %v2203, 0.0
    %v2254 = vmax.f32 %v1618, 0.0
    %v2255 = vmax.f32 %v1814, 0.0
    %v2256 = vmax.f32 %v2010, 0.0
    %v2257 = vmax.f32 %v2206, 0.0
    %v2258 = vmax.f32 %v1620, 0.0
    %v2259 = vmax.f32 %v1816, 0.0
    %v2260 = vmax.f32 %v2012, 0.0
    %v2261 = vmax.f32 %v2208, 0.0
    %v2262 = vmax.f32 %v1623, 0.0
    %v2263 = vmax.f32 %v1819, 0.0
    %v2264 = vmax.f32 %v2015, 0.0
    %v2265 = vmax.f32 %v2211, 0.0
    %v2266 = vmax.f32 %v1625, 0.0
    %v2267 = vmax.f32 %v1821, 0.0
    %v2268 = vmax.f32 %v2017, 0.0
    %v2269 = vmax.f32 %v2213, 0.0
    %v2270 = vmax.f32 %v1628, 0.0
    %v2271 = vmax.f32 %v1824, 0.0
    %v2272 = vmax.f32 %v2020, 0.0
    %v2273 = vmax.f32 %v2216, 0.0
    %v2274 = vmax.f32 %v1630, 0.0
    %v2275 = vmax.f32 %v1826, 0.0
    %v2276 = vmax.f32 %v2022, 0.0
    %v2277 = vmax.f32 %v2218, 0.0
    %v2278 = vmax.f32 %v1633, 0.0
    %v2279 = vmax.f32 %v1829, 0.0
    %v2280 = vmax.f32 %v2025, 0.0
    %v2281 = vmax.f32 %v2221, 0.0
    %v2282 = vmax.f32 %v1635, 0.0
    %v2283 = vmax.f32 %v1831, 0.0
    %v2284 = vmax.f32 %v2027, 0.0
    %v2285 = vmax.f32 %v2223, 0.0
    %v2286 = vmax.f32 %v1638, 0.0
    %v2287 = vmax.f32 %v1834, 0.0
    %v2288 = vmax.f32 %v2030, 0.0
    %v2289 = vmax.f32 %v2226, 0.0
    %v2290 = vmax.f32 %v1640, 0.0
    %v2291 = vmax.f32 %v1836, 0.0
    %v2292 = vmax.f32 %v2032, 0.0
    %v2293 = vmax.f32 %v2228, 0.0
    %v2294 = vpack.c.bf16 %v2234, %v2230
    %v2295 = vpack.c.bf16 %v2235, %v2231
    %v2296 = vpack.c.bf16 %v2236, %v2232
    %v2297 = vpack.c.bf16 %v2237, %v2233
    %v2298 = vpack.c.bf16 %v2242, %v2238
    %v2299 = vpack.c.bf16 %v2243, %v2239
    %v2300 = vpack.c.bf16 %v2244, %v2240
    %v2301 = vpack.c.bf16 %v2245, %v2241
    %v2302 = vpack.c.bf16 %v2250, %v2246
    %v2303 = vpack.c.bf16 %v2251, %v2247
    %v2304 = vpack.c.bf16 %v2252, %v2248
    %v2305 = vpack.c.bf16 %v2253, %v2249
    %v2306 = vpack.c.bf16 %v2258, %v2254
    %v2307 = vpack.c.bf16 %v2259, %v2255
    %v2308 = vpack.c.bf16 %v2260, %v2256
    %v2309 = vpack.c.bf16 %v2261, %v2257
    %v2310 = vpack.c.bf16 %v2266, %v2262
    %v2311 = vpack.c.bf16 %v2267, %v2263
    %v2312 = vpack.c.bf16 %v2268, %v2264
    %v2313 = vpack.c.bf16 %v2269, %v2265
    %v2314 = vpack.c.bf16 %v2274, %v2270
    %v2315 = vpack.c.bf16 %v2275, %v2271
    %v2316 = vpack.c.bf16 %v2276, %v2272
    %v2317 = vpack.c.bf16 %v2277, %v2273
    %v2318 = vpack.c.bf16 %v2282, %v2278
    %v2319 = vpack.c.bf16 %v2283, %v2279
    %v2320 = vpack.c.bf16 %v2284, %v2280
    %v2321 = vpack.c.bf16 %v2285, %v2281
    %v2322 = vpack.c.bf16 %v2290, %v2286
    %v2323 = vpack.c.bf16 %v2291, %v2287
    %v2324 = vpack.c.bf16 %v2292, %v2288
    %v2325 = vpack.c.bf16 %v2293, %v2289
    %v2326 = vld [vmem:[#allocation10] sm:$0xff]
    %v2327 = vld [vmem:[#allocation10 + $0x8] sm:$0xff]
    %v2328 = vld [vmem:[#allocation10 + $0x10] sm:$0xff]
    %v2329 = vld [vmem:[#allocation10 + $0x18] sm:$0xff]
    %v2330 = vld [vmem:[#allocation10 + $0x20] sm:$0xff]
    %v2331 = vld [vmem:[#allocation10 + $0x28] sm:$0xff]
    %v2332 = vld [vmem:[#allocation10 + $0x30] sm:$0xff]
    %v2333 = vld [vmem:[#allocation10 + $0x38] sm:$0xff]
    %v2334 = vld [vmem:[#allocation10 + $0x40] sm:$0xff]
    %v2335 = vld [vmem:[#allocation10 + $0x48] sm:$0xff]
    %v2336 = vld [vmem:[#allocation10 + $0x50] sm:$0xff]
    %v2337 = vld [vmem:[#allocation10 + $0x58] sm:$0xff]
    %v2338 = vld [vmem:[#allocation10 + $0x60] sm:$0xff]
    %v2339 = vld [vmem:[#allocation10 + $0x68] sm:$0xff]
    %v2340 = vld [vmem:[#allocation10 + $0x70] sm:$0xff]
    %v2341 = vld [vmem:[#allocation10 + $0x78] sm:$0xff]
    %v2342 = vld [vmem:[#allocation10 + $0x80] sm:$0xff]
    %v2343 = vld [vmem:[#allocation10 + $0x88] sm:$0xff]
    %v2344 = vld [vmem:[#allocation10 + $0x90] sm:$0xff]
    %v2345 = vld [vmem:[#allocation10 + $0x98] sm:$0xff]
    %v2346 = vld [vmem:[#allocation10 + $0xa0] sm:$0xff]
    %v2347 = vld [vmem:[#allocation10 + $0xa8] sm:$0xff]
    %v2348 = vld [vmem:[#allocation10 + $0xb0] sm:$0xff]
    %v2349 = vld [vmem:[#allocation10 + $0xb8] sm:$0xff]
    %v2350 = vld [vmem:[#allocation10 + $0xc0] sm:$0xff]
    %v2351 = vld [vmem:[#allocation10 + $0xc8] sm:$0xff]
    %v2352 = vld [vmem:[#allocation10 + $0xd0] sm:$0xff]
    %v2353 = vld [vmem:[#allocation10 + $0xd8] sm:$0xff]
    %v2354 = vld [vmem:[#allocation10 + $0xe0] sm:$0xff]
    %v2355 = vld [vmem:[#allocation10 + $0xe8] sm:$0xff]
    %v2356 = vld [vmem:[#allocation10 + $0xf0] sm:$0xff]
    %v2357 = vld [vmem:[#allocation10 + $0xf8] sm:$0xff]
    %v2358 = vld [vmem:[#allocation10 + $0x100] sm:$0xff]
    %v2359 = vld [vmem:[#allocation10 + $0x108] sm:$0xff]
    %v2360 = vld [vmem:[#allocation10 + $0x110] sm:$0xff]
    %v2361 = vld [vmem:[#allocation10 + $0x118] sm:$0xff]
    %v2362 = vld [vmem:[#allocation10 + $0x120] sm:$0xff]
    %v2363 = vld [vmem:[#allocation10 + $0x128] sm:$0xff]
    %v2364 = vld [vmem:[#allocation10 + $0x130] sm:$0xff]
    %v2365 = vld [vmem:[#allocation10 + $0x138] sm:$0xff]
    %v2366 = vld [vmem:[#allocation10 + $0x140] sm:$0xff]
    %v2367 = vld [vmem:[#allocation10 + $0x148] sm:$0xff]
    %v2368 = vld [vmem:[#allocation10 + $0x150] sm:$0xff]
    %v2369 = vld [vmem:[#allocation10 + $0x158] sm:$0xff]
    %v2370 = vld [vmem:[#allocation10 + $0x160] sm:$0xff]
    %v2371 = vld [vmem:[#allocation10 + $0x168] sm:$0xff]
    %v2372 = vld [vmem:[#allocation10 + $0x170] sm:$0xff]
    %v2373 = vld [vmem:[#allocation10 + $0x178] sm:$0xff]
    %v2374 = vld [vmem:[#allocation10 + $0x180] sm:$0xff]
    %v2375 = vld [vmem:[#allocation10 + $0x188] sm:$0xff]
    %v2376 = vld [vmem:[#allocation10 + $0x190] sm:$0xff]
    %v2377 = vld [vmem:[#allocation10 + $0x198] sm:$0xff]
    %v2378 = vld [vmem:[#allocation10 + $0x1a0] sm:$0xff]
    %v2379 = vld [vmem:[#allocation10 + $0x1a8] sm:$0xff]
    %v2380 = vld [vmem:[#allocation10 + $0x1b0] sm:$0xff]
    %v2381 = vld [vmem:[#allocation10 + $0x1b8] sm:$0xff]
    %v2382 = vld [vmem:[#allocation10 + $0x1c0] sm:$0xff]
    %v2383 = vld [vmem:[#allocation10 + $0x1c8] sm:$0xff]
    %v2384 = vld [vmem:[#allocation10 + $0x1d0] sm:$0xff]
    %v2385 = vld [vmem:[#allocation10 + $0x1d8] sm:$0xff]
    %v2386 = vld [vmem:[#allocation10 + $0x1e0] sm:$0xff]
    %v2387 = vld [vmem:[#allocation10 + $0x1e8] sm:$0xff]
    %v2388 = vld [vmem:[#allocation10 + $0x1f0] sm:$0xff]
    %v2389 = vld [vmem:[#allocation10 + $0x1f8] sm:$0xff]
    %v2390 = vld [vmem:[%s6] sm:$0x3]
    %v2392 = vperm.slane %v2390, 0
    %v2393 = vperm.slane %v2390, 1
    %v2460 = vunpack.c.l.b16 %v2326
    %v2461 = vunpack.c.h.b16 %v2326
    %v2462 = vunpack.c.l.b16 %v2327
    %v2463 = vunpack.c.h.b16 %v2327
    %v2464 = vunpack.c.l.b16 %v2328
    %v2465 = vunpack.c.h.b16 %v2328
    %v2466 = vunpack.c.l.b16 %v2329
    %v2467 = vunpack.c.h.b16 %v2329
    %v2468 = vunpack.c.l.b16 %v2330
    %v2469 = vunpack.c.h.b16 %v2330
    %v2470 = vunpack.c.l.b16 %v2331
    %v2471 = vunpack.c.h.b16 %v2331
    %v2472 = vunpack.c.l.b16 %v2332
    %v2473 = vunpack.c.h.b16 %v2332
    %v2474 = vunpack.c.l.b16 %v2333
    %v2475 = vunpack.c.h.b16 %v2333
    %v2476 = vunpack.c.l.b16 %v2334
    %v2477 = vunpack.c.h.b16 %v2334
    %v2478 = vunpack.c.l.b16 %v2335
    %v2479 = vunpack.c.h.b16 %v2335
    %v2480 = vunpack.c.l.b16 %v2336
    %v2481 = vunpack.c.h.b16 %v2336
    %v2482 = vunpack.c.l.b16 %v2337
    %v2483 = vunpack.c.h.b16 %v2337
    %v2484 = vunpack.c.l.b16 %v2338
    %v2485 = vunpack.c.h.b16 %v2338
    %v2486 = vunpack.c.l.b16 %v2339
    %v2487 = vunpack.c.h.b16 %v2339
    %v2488 = vunpack.c.l.b16 %v2340
    %v2489 = vunpack.c.h.b16 %v2340
    %v2490 = vunpack.c.l.b16 %v2341
    %v2491 = vunpack.c.h.b16 %v2341
    %v2492 = vunpack.c.l.b16 %v2342
    %v2493 = vunpack.c.h.b16 %v2342
    %v2494 = vunpack.c.l.b16 %v2343
    %v2495 = vunpack.c.h.b16 %v2343
    %v2496 = vunpack.c.l.b16 %v2344
    %v2497 = vunpack.c.h.b16 %v2344
    %v2498 = vunpack.c.l.b16 %v2345
    %v2499 = vunpack.c.h.b16 %v2345
    %v2500 = vunpack.c.l.b16 %v2346
    %v2501 = vunpack.c.h.b16 %v2346
    %v2502 = vunpack.c.l.b16 %v2347
    %v2503 = vunpack.c.h.b16 %v2347
    %v2504 = vunpack.c.l.b16 %v2348
    %v2505 = vunpack.c.h.b16 %v2348
    %v2506 = vunpack.c.l.b16 %v2349
    %v2507 = vunpack.c.h.b16 %v2349
    %v2508 = vunpack.c.l.b16 %v2350
    %v2509 = vunpack.c.h.b16 %v2350
    %v2510 = vunpack.c.l.b16 %v2351
    %v2511 = vunpack.c.h.b16 %v2351
    %v2512 = vunpack.c.l.b16 %v2352
    %v2513 = vunpack.c.h.b16 %v2352
    %v2514 = vunpack.c.l.b16 %v2353
    %v2515 = vunpack.c.h.b16 %v2353
    %v2516 = vunpack.c.l.b16 %v2354
    %v2517 = vunpack.c.h.b16 %v2354
    %v2518 = vunpack.c.l.b16 %v2355
    %v2519 = vunpack.c.h.b16 %v2355
    %v2520 = vunpack.c.l.b16 %v2356
    %v2521 = vunpack.c.h.b16 %v2356
    %v2522 = vunpack.c.l.b16 %v2357
    %v2523 = vunpack.c.h.b16 %v2357
    %v2524 = vunpack.c.l.b16 %v2358
    %v2525 = vunpack.c.h.b16 %v2358
    %v2526 = vunpack.c.l.b16 %v2359
    %v2527 = vunpack.c.h.b16 %v2359
    %v2528 = vunpack.c.l.b16 %v2360
    %v2529 = vunpack.c.h.b16 %v2360
    %v2530 = vunpack.c.l.b16 %v2361
    %v2531 = vunpack.c.h.b16 %v2361
    %v2532 = vunpack.c.l.b16 %v2362
    %v2533 = vunpack.c.h.b16 %v2362
    %v2534 = vunpack.c.l.b16 %v2363
    %v2535 = vunpack.c.h.b16 %v2363
    %v2536 = vunpack.c.l.b16 %v2364
    %v2537 = vunpack.c.h.b16 %v2364
    %v2538 = vunpack.c.l.b16 %v2365
    %v2539 = vunpack.c.h.b16 %v2365
    %v2540 = vunpack.c.l.b16 %v2366
    %v2541 = vunpack.c.h.b16 %v2366
    %v2542 = vunpack.c.l.b16 %v2367
    %v2543 = vunpack.c.h.b16 %v2367
    %v2544 = vunpack.c.l.b16 %v2368
    %v2545 = vunpack.c.h.b16 %v2368
    %v2546 = vunpack.c.l.b16 %v2369
    %v2547 = vunpack.c.h.b16 %v2369
    %v2548 = vunpack.c.l.b16 %v2370
    %v2549 = vunpack.c.h.b16 %v2370
    %v2550 = vunpack.c.l.b16 %v2371
    %v2551 = vunpack.c.h.b16 %v2371
    %v2552 = vunpack.c.l.b16 %v2372
    %v2553 = vunpack.c.h.b16 %v2372
    %v2554 = vunpack.c.l.b16 %v2373
    %v2555 = vunpack.c.h.b16 %v2373
    %v2556 = vunpack.c.l.b16 %v2374
    %v2557 = vunpack.c.h.b16 %v2374
    %v2558 = vunpack.c.l.b16 %v2375
    %v2559 = vunpack.c.h.b16 %v2375
    %v2560 = vunpack.c.l.b16 %v2376
    %v2561 = vunpack.c.h.b16 %v2376
    %v2562 = vunpack.c.l.b16 %v2377
    %v2563 = vunpack.c.h.b16 %v2377
    %v2564 = vunpack.c.l.b16 %v2378
    %v2565 = vunpack.c.h.b16 %v2378
    %v2566 = vunpack.c.l.b16 %v2379
    %v2567 = vunpack.c.h.b16 %v2379
    %v2568 = vunpack.c.l.b16 %v2380
    %v2569 = vunpack.c.h.b16 %v2380
    %v2570 = vunpack.c.l.b16 %v2381
    %v2571 = vunpack.c.h.b16 %v2381
    %v2572 = vunpack.c.l.b16 %v2382
    %v2573 = vunpack.c.h.b16 %v2382
    %v2574 = vunpack.c.l.b16 %v2383
    %v2575 = vunpack.c.h.b16 %v2383
    %v2576 = vunpack.c.l.b16 %v2384
    %v2577 = vunpack.c.h.b16 %v2384
    %v2578 = vunpack.c.l.b16 %v2385
    %v2579 = vunpack.c.h.b16 %v2385
    %v2580 = vunpack.c.l.b16 %v2386
    %v2581 = vunpack.c.h.b16 %v2386
    %v2582 = vunpack.c.l.b16 %v2387
    %v2583 = vunpack.c.h.b16 %v2387
    %v2584 = vunpack.c.l.b16 %v2388
    %v2585 = vunpack.c.h.b16 %v2388
    %v2586 = vunpack.c.l.b16 %v2389
    %v2587 = vunpack.c.h.b16 %v2389
    %v2588 = vpack.c.b16 %v2462, %v2460
    %v2589 = vpack.c.b16 %v2463, %v2461
    %v2590 = vpack.c.b16 %v2466, %v2464
    %v2591 = vpack.c.b16 %v2467, %v2465
    %v2592 = vpack.c.b16 %v2470, %v2468
    %v2593 = vpack.c.b16 %v2471, %v2469
    %v2594 = vpack.c.b16 %v2474, %v2472
    %v2595 = vpack.c.b16 %v2475, %v2473
    %v2596 = vpack.c.b16 %v2478, %v2476
    %v2597 = vpack.c.b16 %v2479, %v2477
    %v2598 = vpack.c.b16 %v2482, %v2480
    %v2599 = vpack.c.b16 %v2483, %v2481
    %v2600 = vpack.c.b16 %v2486, %v2484
    %v2601 = vpack.c.b16 %v2487, %v2485
    %v2602 = vpack.c.b16 %v2490, %v2488
    %v2603 = vpack.c.b16 %v2491, %v2489
    %v2604 = vpack.c.b16 %v2494, %v2492
    %v2605 = vpack.c.b16 %v2495, %v2493
    %v2606 = vpack.c.b16 %v2498, %v2496
    %v2607 = vpack.c.b16 %v2499, %v2497
    %v2608 = vpack.c.b16 %v2502, %v2500
    %v2609 = vpack.c.b16 %v2503, %v2501
    %v2610 = vpack.c.b16 %v2506, %v2504
    %v2611 = vpack.c.b16 %v2507, %v2505
    %v2612 = vpack.c.b16 %v2510, %v2508
    %v2613 = vpack.c.b16 %v2511, %v2509
    %v2614 = vpack.c.b16 %v2514, %v2512
    %v2615 = vpack.c.b16 %v2515, %v2513
    %v2616 = vpack.c.b16 %v2518, %v2516
    %v2617 = vpack.c.b16 %v2519, %v2517
    %v2618 = vpack.c.b16 %v2522, %v2520
    %v2619 = vpack.c.b16 %v2523, %v2521
    %v2620 = vpack.c.b16 %v2526, %v2524
    %v2621 = vpack.c.b16 %v2527, %v2525
    %v2622 = vpack.c.b16 %v2530, %v2528
    %v2623 = vpack.c.b16 %v2531, %v2529
    %v2624 = vpack.c.b16 %v2534, %v2532
    %v2625 = vpack.c.b16 %v2535, %v2533
    %v2626 = vpack.c.b16 %v2538, %v2536
    %v2627 = vpack.c.b16 %v2539, %v2537
    %v2628 = vpack.c.b16 %v2542, %v2540
    %v2629 = vpack.c.b16 %v2543, %v2541
    %v2630 = vpack.c.b16 %v2546, %v2544
    %v2631 = vpack.c.b16 %v2547, %v2545
    %v2632 = vpack.c.b16 %v2550, %v2548
    %v2633 = vpack.c.b16 %v2551, %v2549
    %v2634 = vpack.c.b16 %v2554, %v2552
    %v2635 = vpack.c.b16 %v2555, %v2553
    %v2636 = vpack.c.b16 %v2558, %v2556
    %v2637 = vpack.c.b16 %v2559, %v2557
    %v2638 = vpack.c.b16 %v2562, %v2560
    %v2639 = vpack.c.b16 %v2563, %v2561
    %v2640 = vpack.c.b16 %v2566, %v2564
    %v2641 = vpack.c.b16 %v2567, %v2565
    %v2642 = vpack.c.b16 %v2570, %v2568
    %v2643 = vpack.c.b16 %v2571, %v2569
    %v2644 = vpack.c.b16 %v2574, %v2572
    %v2645 = vpack.c.b16 %v2575, %v2573
    %v2646 = vpack.c.b16 %v2578, %v2576
    %v2647 = vpack.c.b16 %v2579, %v2577
    %v2648 = vpack.c.b16 %v2582, %v2580
    %v2649 = vpack.c.b16 %v2583, %v2581
    %v2650 = vpack.c.b16 %v2586, %v2584
    %v2651 = vpack.c.b16 %v2587, %v2585
    %2716 = vmatpush.bf16.msra.mxu0 %v2602
    %2717 = vmatpush.bf16.msra.mxu0 %v2600
    %2718 = vmatpush.bf16.msra.mxu0 %v2598
    %2719 = vmatpush.bf16.msra.mxu0 %v2596
    %2720 = vmatpush.bf16.msra.mxu0 %v2594
    %2721 = vmatpush.bf16.msra.mxu0 %v2592
    %2722 = vmatpush.bf16.msra.mxu0 %v2590
    %2723 = vmatpush.bf16.msra.mxu0 %v2588
    %2724 = vmatmul.bf16.gmra.mxu0 %v2294
    %v2725 = vpop.f32.mrf.mxu0
    %v2726 = vadd.f32 %v2392, %v2725
    %v2727 = vpop.f32.mrf.mxu0
    %v2728 = vadd.f32 %v2392, %v2727
    %2729 = vmatmul.bf16.gmra.mxu0 %v2298
    %v2730 = vpop.f32.mrf.mxu0
    %v2731 = vadd.f32 %v2392, %v2730
    %v2732 = vpop.f32.mrf.mxu0
    %v2733 = vadd.f32 %v2392, %v2732
    %2734 = vmatmul.bf16.gmra.mxu0 %v2302
    %v2735 = vpop.f32.mrf.mxu0
    %v2736 = vadd.f32 %v2392, %v2735
    %v2737 = vpop.f32.mrf.mxu0
    %v2738 = vadd.f32 %v2392, %v2737
    %2739 = vmatmul.bf16.gmra.mxu0 %v2306
    %v2740 = vpop.f32.mrf.mxu0
    %v2741 = vadd.f32 %v2392, %v2740
    %v2742 = vpop.f32.mrf.mxu0
    %v2743 = vadd.f32 %v2392, %v2742
    %2744 = vmatmul.bf16.gmra.mxu0 %v2310
    %v2745 = vpop.f32.mrf.mxu0
    %v2746 = vadd.f32 %v2392, %v2745
    %v2747 = vpop.f32.mrf.mxu0
    %v2748 = vadd.f32 %v2392, %v2747
    %2749 = vmatmul.bf16.gmra.mxu0 %v2314
    %v2750 = vpop.f32.mrf.mxu0
    %v2751 = vadd.f32 %v2392, %v2750
    %v2752 = vpop.f32.mrf.mxu0
    %v2753 = vadd.f32 %v2392, %v2752
    %2754 = vmatmul.bf16.gmra.mxu0 %v2318
    %v2755 = vpop.f32.mrf.mxu0
    %v2756 = vadd.f32 %v2392, %v2755
    %v2757 = vpop.f32.mrf.mxu0
    %v2758 = vadd.f32 %v2392, %v2757
    %2759 = vmatmul.bf16.gmra.mxu0 %v2322
    %v2760 = vpop.f32.mrf.mxu0
    %v2761 = vadd.f32 %v2392, %v2760
    %v2762 = vpop.f32.mrf.mxu0
    %v2763 = vadd.f32 %v2392, %v2762
    %2764 = vdwg.mxu0
    %2765 = vmatpush.bf16.msra.mxu0 %v2618
    %2766 = vmatpush.bf16.msra.mxu0 %v2616
    %2767 = vmatpush.bf16.msra.mxu0 %v2614
    %2768 = vmatpush.bf16.msra.mxu0 %v2612
    %2769 = vmatpush.bf16.msra.mxu0 %v2610
    %2770 = vmatpush.bf16.msra.mxu0 %v2608
    %2771 = vmatpush.bf16.msra.mxu0 %v2606
    %2772 = vmatpush.bf16.msra.mxu0 %v2604
    %2773 = vmatmul.bf16.gmra.mxu0 %v2295
    %v2774 = vpop.f32.mrf.mxu0
    %v2775 = vadd.f32 %v2726, %v2774
    %v2776 = vpop.f32.mrf.mxu0
    %v2777 = vadd.f32 %v2728, %v2776
    %2778 = vmatmul.bf16.gmra.mxu0 %v2299
    %v2779 = vpop.f32.mrf.mxu0
    %v2780 = vadd.f32 %v2731, %v2779
    %v2781 = vpop.f32.mrf.mxu0
    %v2782 = vadd.f32 %v2733, %v2781
    %2783 = vmatmul.bf16.gmra.mxu0 %v2303
    %v2784 = vpop.f32.mrf.mxu0
    %v2785 = vadd.f32 %v2736, %v2784
    %v2786 = vpop.f32.mrf.mxu0
    %v2787 = vadd.f32 %v2738, %v2786
    %2788 = vmatmul.bf16.gmra.mxu0 %v2307
    %v2789 = vpop.f32.mrf.mxu0
    %v2790 = vadd.f32 %v2741, %v2789
    %v2791 = vpop.f32.mrf.mxu0
    %v2792 = vadd.f32 %v2743, %v2791
    %2793 = vmatmul.bf16.gmra.mxu0 %v2311
    %v2794 = vpop.f32.mrf.mxu0
    %v2795 = vadd.f32 %v2746, %v2794
    %v2796 = vpop.f32.mrf.mxu0
    %v2797 = vadd.f32 %v2748, %v2796
    %2798 = vmatmul.bf16.gmra.mxu0 %v2315
    %v2799 = vpop.f32.mrf.mxu0
    %v2800 = vadd.f32 %v2751, %v2799
    %v2801 = vpop.f32.mrf.mxu0
    %v2802 = vadd.f32 %v2753, %v2801
    %2803 = vmatmul.bf16.gmra.mxu0 %v2319
    %v2804 = vpop.f32.mrf.mxu0
    %v2805 = vadd.f32 %v2756, %v2804
    %v2806 = vpop.f32.mrf.mxu0
    %v2807 = vadd.f32 %v2758, %v2806
    %2808 = vmatmul.bf16.gmra.mxu0 %v2323
    %v2809 = vpop.f32.mrf.mxu0
    %v2810 = vadd.f32 %v2761, %v2809
    %v2811 = vpop.f32.mrf.mxu0
    %v2812 = vadd.f32 %v2763, %v2811
    %2813 = vdwg.mxu0
    %2814 = vmatpush.bf16.msra.mxu0 %v2634
    %2815 = vmatpush.bf16.msra.mxu0 %v2632
    %2816 = vmatpush.bf16.msra.mxu0 %v2630
    %2817 = vmatpush.bf16.msra.mxu0 %v2628
    %2818 = vmatpush.bf16.msra.mxu0 %v2626
    %2819 = vmatpush.bf16.msra.mxu0 %v2624
    %2820 = vmatpush.bf16.msra.mxu0 %v2622
    %2821 = vmatpush.bf16.msra.mxu0 %v2620
    %2822 = vmatmul.bf16.gmra.mxu0 %v2296
    %v2823 = vpop.f32.mrf.mxu0
    %v2824 = vadd.f32 %v2775, %v2823
    %v2825 = vpop.f32.mrf.mxu0
    %v2826 = vadd.f32 %v2777, %v2825
    %2827 = vmatmul.bf16.gmra.mxu0 %v2300
    %v2828 = vpop.f32.mrf.mxu0
    %v2829 = vadd.f32 %v2780, %v2828
    %v2830 = vpop.f32.mrf.mxu0
    %v2831 = vadd.f32 %v2782, %v2830
    %2832 = vmatmul.bf16.gmra.mxu0 %v2304
    %v2833 = vpop.f32.mrf.mxu0
    %v2834 = vadd.f32 %v2785, %v2833
    %v2835 = vpop.f32.mrf.mxu0
    %v2836 = vadd.f32 %v2787, %v2835
    %2837 = vmatmul.bf16.gmra.mxu0 %v2308
    %v2838 = vpop.f32.mrf.mxu0
    %v2839 = vadd.f32 %v2790, %v2838
    %v2840 = vpop.f32.mrf.mxu0
    %v2841 = vadd.f32 %v2792, %v2840
    %2842 = vmatmul.bf16.gmra.mxu0 %v2312
    %v2843 = vpop.f32.mrf.mxu0
    %v2844 = vadd.f32 %v2795, %v2843
    %v2845 = vpop.f32.mrf.mxu0
    %v2846 = vadd.f32 %v2797, %v2845
    %2847 = vmatmul.bf16.gmra.mxu0 %v2316
    %v2848 = vpop.f32.mrf.mxu0
    %v2849 = vadd.f32 %v2800, %v2848
    %v2850 = vpop.f32.mrf.mxu0
    %v2851 = vadd.f32 %v2802, %v2850
    %2852 = vmatmul.bf16.gmra.mxu0 %v2320
    %v2853 = vpop.f32.mrf.mxu0
    %v2854 = vadd.f32 %v2805, %v2853
    %v2855 = vpop.f32.mrf.mxu0
    %v2856 = vadd.f32 %v2807, %v2855
    %2857 = vmatmul.bf16.gmra.mxu0 %v2324
    %v2858 = vpop.f32.mrf.mxu0
    %v2859 = vadd.f32 %v2810, %v2858
    %v2860 = vpop.f32.mrf.mxu0
    %v2861 = vadd.f32 %v2812, %v2860
    %2862 = vdwg.mxu0
    %2863 = vmatpush.bf16.msra.mxu0 %v2650
    %2864 = vmatpush.bf16.msra.mxu0 %v2648
    %2865 = vmatpush.bf16.msra.mxu0 %v2646
    %2866 = vmatpush.bf16.msra.mxu0 %v2644
    %2867 = vmatpush.bf16.msra.mxu0 %v2642
    %2868 = vmatpush.bf16.msra.mxu0 %v2640
    %2869 = vmatpush.bf16.msra.mxu0 %v2638
    %2870 = vmatpush.bf16.msra.mxu0 %v2636
    %2871 = vmatmul.bf16.gmra.mxu0 %v2297
    %v2872 = vpop.f32.mrf.mxu0
    %v2873 = vadd.f32 %v2824, %v2872
    %v2874 = vpop.f32.mrf.mxu0
    %v2875 = vadd.f32 %v2826, %v2874
    %2876 = vmatmul.bf16.gmra.mxu0 %v2301
    %v2877 = vpop.f32.mrf.mxu0
    %v2878 = vadd.f32 %v2829, %v2877
    %v2879 = vpop.f32.mrf.mxu0
    %v2880 = vadd.f32 %v2831, %v2879
    %2881 = vmatmul.bf16.gmra.mxu0 %v2305
    %v2882 = vpop.f32.mrf.mxu0
    %v2883 = vadd.f32 %v2834, %v2882
    %v2884 = vpop.f32.mrf.mxu0
    %v2885 = vadd.f32 %v2836, %v2884
    %2886 = vmatmul.bf16.gmra.mxu0 %v2309
    %v2887 = vpop.f32.mrf.mxu0
    %v2888 = vadd.f32 %v2839, %v2887
    %v2889 = vpop.f32.mrf.mxu0
    %v2890 = vadd.f32 %v2841, %v2889
    %2891 = vmatmul.bf16.gmra.mxu0 %v2313
    %v2892 = vpop.f32.mrf.mxu0
    %v2893 = vadd.f32 %v2844, %v2892
    %v2894 = vpop.f32.mrf.mxu0
    %v2895 = vadd.f32 %v2846, %v2894
    %2896 = vmatmul.bf16.gmra.mxu0 %v2317
    %v2897 = vpop.f32.mrf.mxu0
    %v2898 = vadd.f32 %v2849, %v2897
    %v2899 = vpop.f32.mrf.mxu0
    %v2900 = vadd.f32 %v2851, %v2899
    %2901 = vmatmul.bf16.gmra.mxu0 %v2321
    %v2902 = vpop.f32.mrf.mxu0
    %v2903 = vadd.f32 %v2854, %v2902
    %v2904 = vpop.f32.mrf.mxu0
    %v2905 = vadd.f32 %v2856, %v2904
    %2906 = vmatmul.bf16.gmra.mxu0 %v2325
    %v2907 = vpop.f32.mrf.mxu0
    %v2908 = vadd.f32 %v2859, %v2907
    %v2909 = vpop.f32.mrf.mxu0
    %v2910 = vadd.f32 %v2861, %v2909
    %2911 = vdwg.mxu0
    %2912 = vmatpush.bf16.msra.mxu0 %v2603
    %2913 = vmatpush.bf16.msra.mxu0 %v2601
    %2914 = vmatpush.bf16.msra.mxu0 %v2599
    %2915 = vmatpush.bf16.msra.mxu0 %v2597
    %2916 = vmatpush.bf16.msra.mxu0 %v2595
    %2917 = vmatpush.bf16.msra.mxu0 %v2593
    %2918 = vmatpush.bf16.msra.mxu0 %v2591
    %2919 = vmatpush.bf16.msra.mxu0 %v2589
    %2920 = vmatmul.bf16.gmra.mxu0 %v2294
    %v2921 = vpop.f32.mrf.mxu0
    %v2922 = vadd.f32 %v2393, %v2921
    %v2923 = vpop.f32.mrf.mxu0
    %v2924 = vadd.f32 %v2393, %v2923
    %2925 = vmatmul.bf16.gmra.mxu0 %v2298
    %v2926 = vpop.f32.mrf.mxu0
    %v2927 = vadd.f32 %v2393, %v2926
    %v2928 = vpop.f32.mrf.mxu0
    %v2929 = vadd.f32 %v2393, %v2928
    %2930 = vmatmul.bf16.gmra.mxu0 %v2302
    %v2931 = vpop.f32.mrf.mxu0
    %v2932 = vadd.f32 %v2393, %v2931
    %v2933 = vpop.f32.mrf.mxu0
    %v2934 = vadd.f32 %v2393, %v2933
    %2935 = vmatmul.bf16.gmra.mxu0 %v2306
    %v2936 = vpop.f32.mrf.mxu0
    %v2937 = vadd.f32 %v2393, %v2936
    %v2938 = vpop.f32.mrf.mxu0
    %v2939 = vadd.f32 %v2393, %v2938
    %2940 = vmatmul.bf16.gmra.mxu0 %v2310
    %v2941 = vpop.f32.mrf.mxu0
    %v2942 = vadd.f32 %v2393, %v2941
    %v2943 = vpop.f32.mrf.mxu0
    %v2944 = vadd.f32 %v2393, %v2943
    %2945 = vmatmul.bf16.gmra.mxu0 %v2314
    %v2946 = vpop.f32.mrf.mxu0
    %v2947 = vadd.f32 %v2393, %v2946
    %v2948 = vpop.f32.mrf.mxu0
    %v2949 = vadd.f32 %v2393, %v2948
    %2950 = vmatmul.bf16.gmra.mxu0 %v2318
    %v2951 = vpop.f32.mrf.mxu0
    %v2952 = vadd.f32 %v2393, %v2951
    %v2953 = vpop.f32.mrf.mxu0
    %v2954 = vadd.f32 %v2393, %v2953
    %2955 = vmatmul.bf16.gmra.mxu0 %v2322
    %v2956 = vpop.f32.mrf.mxu0
    %v2957 = vadd.f32 %v2393, %v2956
    %v2958 = vpop.f32.mrf.mxu0
    %v2959 = vadd.f32 %v2393, %v2958
    %2960 = vdwg.mxu0
    %2961 = vmatpush.bf16.msra.mxu0 %v2619
    %2962 = vmatpush.bf16.msra.mxu0 %v2617
    %2963 = vmatpush.bf16.msra.mxu0 %v2615
    %2964 = vmatpush.bf16.msra.mxu0 %v2613
    %2965 = vmatpush.bf16.msra.mxu0 %v2611
    %2966 = vmatpush.bf16.msra.mxu0 %v2609
    %2967 = vmatpush.bf16.msra.mxu0 %v2607
    %2968 = vmatpush.bf16.msra.mxu0 %v2605
    %2969 = vmatmul.bf16.gmra.mxu0 %v2295
    %v2970 = vpop.f32.mrf.mxu0
    %v2971 = vadd.f32 %v2922, %v2970
    %v2972 = vpop.f32.mrf.mxu0
    %v2973 = vadd.f32 %v2924, %v2972
    %2974 = vmatmul.bf16.gmra.mxu0 %v2299
    %v2975 = vpop.f32.mrf.mxu0
    %v2976 = vadd.f32 %v2927, %v2975
    %v2977 = vpop.f32.mrf.mxu0
    %v2978 = vadd.f32 %v2929, %v2977
    %2979 = vmatmul.bf16.gmra.mxu0 %v2303
    %v2980 = vpop.f32.mrf.mxu0
    %v2981 = vadd.f32 %v2932, %v2980
    %v2982 = vpop.f32.mrf.mxu0
    %v2983 = vadd.f32 %v2934, %v2982
    %2984 = vmatmul.bf16.gmra.mxu0 %v2307
    %v2985 = vpop.f32.mrf.mxu0
    %v2986 = vadd.f32 %v2937, %v2985
    %v2987 = vpop.f32.mrf.mxu0
    %v2988 = vadd.f32 %v2939, %v2987
    %2989 = vmatmul.bf16.gmra.mxu0 %v2311
    %v2990 = vpop.f32.mrf.mxu0
    %v2991 = vadd.f32 %v2942, %v2990
    %v2992 = vpop.f32.mrf.mxu0
    %v2993 = vadd.f32 %v2944, %v2992
    %2994 = vmatmul.bf16.gmra.mxu0 %v2315
    %v2995 = vpop.f32.mrf.mxu0
    %v2996 = vadd.f32 %v2947, %v2995
    %v2997 = vpop.f32.mrf.mxu0
    %v2998 = vadd.f32 %v2949, %v2997
    %2999 = vmatmul.bf16.gmra.mxu0 %v2319
    %v3000 = vpop.f32.mrf.mxu0
    %v3001 = vadd.f32 %v2952, %v3000
    %v3002 = vpop.f32.mrf.mxu0
    %v3003 = vadd.f32 %v2954, %v3002
    %3004 = vmatmul.bf16.gmra.mxu0 %v2323
    %v3005 = vpop.f32.mrf.mxu0
    %v3006 = vadd.f32 %v2957, %v3005
    %v3007 = vpop.f32.mrf.mxu0
    %v3008 = vadd.f32 %v2959, %v3007
    %3009 = vdwg.mxu0
    %3010 = vmatpush.bf16.msra.mxu0 %v2635
    %3011 = vmatpush.bf16.msra.mxu0 %v2633
    %3012 = vmatpush.bf16.msra.mxu0 %v2631
    %3013 = vmatpush.bf16.msra.mxu0 %v2629
    %3014 = vmatpush.bf16.msra.mxu0 %v2627
    %3015 = vmatpush.bf16.msra.mxu0 %v2625
    %3016 = vmatpush.bf16.msra.mxu0 %v2623
    %3017 = vmatpush.bf16.msra.mxu0 %v2621
    %3018 = vmatmul.bf16.gmra.mxu0 %v2296
    %v3019 = vpop.f32.mrf.mxu0
    %v3020 = vadd.f32 %v2971, %v3019
    %v3021 = vpop.f32.mrf.mxu0
    %v3022 = vadd.f32 %v2973, %v3021
    %3023 = vmatmul.bf16.gmra.mxu0 %v2300
    %v3024 = vpop.f32.mrf.mxu0
    %v3025 = vadd.f32 %v2976, %v3024
    %v3026 = vpop.f32.mrf.mxu0
    %v3027 = vadd.f32 %v2978, %v3026
    %3028 = vmatmul.bf16.gmra.mxu0 %v2304
    %v3029 = vpop.f32.mrf.mxu0
    %v3030 = vadd.f32 %v2981, %v3029
    %v3031 = vpop.f32.mrf.mxu0
    %v3032 = vadd.f32 %v2983, %v3031
    %3033 = vmatmul.bf16.gmra.mxu0 %v2308
    %v3034 = vpop.f32.mrf.mxu0
    %v3035 = vadd.f32 %v2986, %v3034
    %v3036 = vpop.f32.mrf.mxu0
    %v3037 = vadd.f32 %v2988, %v3036
    %3038 = vmatmul.bf16.gmra.mxu0 %v2312
    %v3039 = vpop.f32.mrf.mxu0
    %v3040 = vadd.f32 %v2991, %v3039
    %v3041 = vpop.f32.mrf.mxu0
    %v3042 = vadd.f32 %v2993, %v3041
    %3043 = vmatmul.bf16.gmra.mxu0 %v2316
    %v3044 = vpop.f32.mrf.mxu0
    %v3045 = vadd.f32 %v2996, %v3044
    %v3046 = vpop.f32.mrf.mxu0
    %v3047 = vadd.f32 %v2998, %v3046
    %3048 = vmatmul.bf16.gmra.mxu0 %v2320
    %v3049 = vpop.f32.mrf.mxu0
    %v3050 = vadd.f32 %v3001, %v3049
    %v3051 = vpop.f32.mrf.mxu0
    %v3052 = vadd.f32 %v3003, %v3051
    %3053 = vmatmul.bf16.gmra.mxu0 %v2324
    %v3054 = vpop.f32.mrf.mxu0
    %v3055 = vadd.f32 %v3006, %v3054
    %v3056 = vpop.f32.mrf.mxu0
    %v3057 = vadd.f32 %v3008, %v3056
    %3058 = vdwg.mxu0
    %3059 = vmatpush.bf16.msra.mxu0 %v2651
    %3060 = vmatpush.bf16.msra.mxu0 %v2649
    %3061 = vmatpush.bf16.msra.mxu0 %v2647
    %3062 = vmatpush.bf16.msra.mxu0 %v2645
    %3063 = vmatpush.bf16.msra.mxu0 %v2643
    %3064 = vmatpush.bf16.msra.mxu0 %v2641
    %3065 = vmatpush.bf16.msra.mxu0 %v2639
    %3066 = vmatpush.bf16.msra.mxu0 %v2637
    %3067 = vmatmul.bf16.gmra.mxu0 %v2297
    %v3068 = vpop.f32.mrf.mxu0
    %v3069 = vadd.f32 %v3020, %v3068
    %v3070 = vpop.f32.mrf.mxu0
    %v3071 = vadd.f32 %v3022, %v3070
    %3072 = vmatmul.bf16.gmra.mxu0 %v2301
    %v3073 = vpop.f32.mrf.mxu0
    %v3074 = vadd.f32 %v3025, %v3073
    %v3075 = vpop.f32.mrf.mxu0
    %v3076 = vadd.f32 %v3027, %v3075
    %3077 = vmatmul.bf16.gmra.mxu0 %v2305
    %v3078 = vpop.f32.mrf.mxu0
    %v3079 = vadd.f32 %v3030, %v3078
    %v3080 = vpop.f32.mrf.mxu0
    %v3081 = vadd.f32 %v3032, %v3080
    %3082 = vmatmul.bf16.gmra.mxu0 %v2309
    %v3083 = vpop.f32.mrf.mxu0
    %v3084 = vadd.f32 %v3035, %v3083
    %v3085 = vpop.f32.mrf.mxu0
    %v3086 = vadd.f32 %v3037, %v3085
    %3087 = vmatmul.bf16.gmra.mxu0 %v2313
    %v3088 = vpop.f32.mrf.mxu0
    %v3089 = vadd.f32 %v3040, %v3088
    %v3090 = vpop.f32.mrf.mxu0
    %v3091 = vadd.f32 %v3042, %v3090
    %3092 = vmatmul.bf16.gmra.mxu0 %v2317
    %v3093 = vpop.f32.mrf.mxu0
    %v3094 = vadd.f32 %v3045, %v3093
    %v3095 = vpop.f32.mrf.mxu0
    %v3096 = vadd.f32 %v3047, %v3095
    %3097 = vmatmul.bf16.gmra.mxu0 %v2321
    %v3098 = vpop.f32.mrf.mxu0
    %v3099 = vadd.f32 %v3050, %v3098
    %v3100 = vpop.f32.mrf.mxu0
    %v3101 = vadd.f32 %v3052, %v3100
    %3102 = vmatmul.bf16.gmra.mxu0 %v2325
    %v3103 = vpop.f32.mrf.mxu0
    %v3104 = vadd.f32 %v3055, %v3103
    %v3105 = vpop.f32.mrf.mxu0
    %v3106 = vadd.f32 %v3057, %v3105
    %3107 = vdwg.mxu0
    %v3108 = vmax.f32 %v2873, 0.0
    %v3109 = vmax.f32 %v3069, 0.0
    %v3110 = vmax.f32 %v2875, 0.0
    %v3111 = vmax.f32 %v3071, 0.0
    %v3112 = vmax.f32 %v2878, 0.0
    %v3113 = vmax.f32 %v3074, 0.0
    %v3114 = vmax.f32 %v2880, 0.0
    %v3115 = vmax.f32 %v3076, 0.0
    %v3116 = vmax.f32 %v2883, 0.0
    %v3117 = vmax.f32 %v3079, 0.0
    %v3118 = vmax.f32 %v2885, 0.0
    %v3119 = vmax.f32 %v3081, 0.0
    %v3120 = vmax.f32 %v2888, 0.0
    %v3121 = vmax.f32 %v3084, 0.0
    %v3122 = vmax.f32 %v2890, 0.0
    %v3123 = vmax.f32 %v3086, 0.0
    %v3124 = vmax.f32 %v2893, 0.0
    %v3125 = vmax.f32 %v3089, 0.0
    %v3126 = vmax.f32 %v2895, 0.0
    %v3127 = vmax.f32 %v3091, 0.0
    %v3128 = vmax.f32 %v2898, 0.0
    %v3129 = vmax.f32 %v3094, 0.0
    %v3130 = vmax.f32 %v2900, 0.0
    %v3131 = vmax.f32 %v3096, 0.0
    %v3132 = vmax.f32 %v2903, 0.0
    %v3133 = vmax.f32 %v3099, 0.0
    %v3134 = vmax.f32 %v2905, 0.0
    %v3135 = vmax.f32 %v3101, 0.0
    %v3136 = vmax.f32 %v2908, 0.0
    %v3137 = vmax.f32 %v3104, 0.0
    %v3138 = vmax.f32 %v2910, 0.0
    %v3139 = vmax.f32 %v3106, 0.0
    %v3140 = vld [vmem:[%s7] sm:$0x3]
    %v3142 = vperm.slane %v3140, 0
    %v3143 = vperm.slane %v3140, 1
    %v3146 = vmul.f32 %v3108, %v3142
    %v3147 = vmul.f32 %v3109, %v3143
    %v3148 = vmul.f32 %v3110, %v3142
    %v3149 = vmul.f32 %v3111, %v3143
    %v3150 = vmul.f32 %v3112, %v3142
    %v3151 = vmul.f32 %v3113, %v3143
    %v3152 = vmul.f32 %v3114, %v3142
    %v3153 = vmul.f32 %v3115, %v3143
    %v3154 = vmul.f32 %v3116, %v3142
    %v3155 = vmul.f32 %v3117, %v3143
    %v3156 = vmul.f32 %v3118, %v3142
    %v3157 = vmul.f32 %v3119, %v3143
    %v3158 = vmul.f32 %v3120, %v3142
    %v3159 = vmul.f32 %v3121, %v3143
    %v3160 = vmul.f32 %v3122, %v3142
    %v3161 = vmul.f32 %v3123, %v3143
    %v3162 = vmul.f32 %v3124, %v3142
    %v3163 = vmul.f32 %v3125, %v3143
    %v3164 = vmul.f32 %v3126, %v3142
    %v3165 = vmul.f32 %v3127, %v3143
    %v3166 = vmul.f32 %v3128, %v3142
    %v3167 = vmul.f32 %v3129, %v3143
    %v3168 = vmul.f32 %v3130, %v3142
    %v3169 = vmul.f32 %v3131, %v3143
    %v3170 = vmul.f32 %v3132, %v3142
    %v3171 = vmul.f32 %v3133, %v3143
    %v3172 = vmul.f32 %v3134, %v3142
    %v3173 = vmul.f32 %v3135, %v3143
    %v3174 = vmul.f32 %v3136, %v3142
    %v3175 = vmul.f32 %v3137, %v3143
    %v3176 = vmul.f32 %v3138, %v3142
    %v3177 = vmul.f32 %v3139, %v3143
    %v3178 = vadd.f32 %v3146, %v3147
    %3179 = vadd.xlane.f32.xlu0 %v3178
    %v3180 = vpop.xlane.xlu0 %3179
    %v3181 = vadd.f32 %v3148, %v3149
    %3182 = vadd.xlane.f32.xlu0 %v3181
    %v3183 = vpop.xlane.xlu0 %3182
    %v3184 = vadd.f32 %v3150, %v3151
    %3185 = vadd.xlane.f32.xlu0 %v3184
    %v3186 = vpop.xlane.xlu0 %3185
    %v3187 = vadd.f32 %v3152, %v3153
    %3188 = vadd.xlane.f32.xlu0 %v3187
    %v3189 = vpop.xlane.xlu0 %3188
    %v3190 = vadd.f32 %v3154, %v3155
    %3191 = vadd.xlane.f32.xlu0 %v3190
    %v3192 = vpop.xlane.xlu0 %3191
    %v3193 = vadd.f32 %v3156, %v3157
    %3194 = vadd.xlane.f32.xlu0 %v3193
    %v3195 = vpop.xlane.xlu0 %3194
    %v3196 = vadd.f32 %v3158, %v3159
    %3197 = vadd.xlane.f32.xlu0 %v3196
    %v3198 = vpop.xlane.xlu0 %3197
    %v3199 = vadd.f32 %v3160, %v3161
    %3200 = vadd.xlane.f32.xlu0 %v3199
    %v3201 = vpop.xlane.xlu0 %3200
    %v3202 = vadd.f32 %v3162, %v3163
    %3203 = vadd.xlane.f32.xlu0 %v3202
    %v3204 = vpop.xlane.xlu0 %3203
    %v3205 = vadd.f32 %v3164, %v3165
    %3206 = vadd.xlane.f32.xlu0 %v3205
    %v3207 = vpop.xlane.xlu0 %3206
    %v3208 = vadd.f32 %v3166, %v3167
    %3209 = vadd.xlane.f32.xlu0 %v3208
    %v3210 = vpop.xlane.xlu0 %3209
    %v3211 = vadd.f32 %v3168, %v3169
    %3212 = vadd.xlane.f32.xlu0 %v3211
    %v3213 = vpop.xlane.xlu0 %3212
    %v3214 = vadd.f32 %v3170, %v3171
    %3215 = vadd.xlane.f32.xlu0 %v3214
    %v3216 = vpop.xlane.xlu0 %3215
    %v3217 = vadd.f32 %v3172, %v3173
    %3218 = vadd.xlane.f32.xlu0 %v3217
    %v3219 = vpop.xlane.xlu0 %3218
    %v3220 = vadd.f32 %v3174, %v3175
    %3221 = vadd.xlane.f32.xlu0 %v3220
    %v3222 = vpop.xlane.xlu0 %3221
    %v3223 = vadd.f32 %v3176, %v3177
    %3224 = vadd.xlane.f32.xlu0 %v3223
    %v3225 = vpop.xlane.xlu0 %3224
    %v3226 = vld [vmem:[#allocation2] sm:$0x1]
    %v3228 = vperm.slane %v3226, 0
    %v3230 = vadd.f32 %v3180, %v3228
    %v3231 = vadd.f32 %v3183, %v3228
    %v3232 = vadd.f32 %v3186, %v3228
    %v3233 = vadd.f32 %v3189, %v3228
    %v3234 = vadd.f32 %v3192, %v3228
    %v3235 = vadd.f32 %v3195, %v3228
    %v3236 = vadd.f32 %v3198, %v3228
    %v3237 = vadd.f32 %v3201, %v3228
    %v3238 = vadd.f32 %v3204, %v3228
    %v3239 = vadd.f32 %v3207, %v3228
    %v3240 = vadd.f32 %v3210, %v3228
    %v3241 = vadd.f32 %v3213, %v3228
    %v3242 = vadd.f32 %v3216, %v3228
    %v3243 = vadd.f32 %v3219, %v3228
    %v3244 = vadd.f32 %v3222, %v3228
    %v3245 = vadd.f32 %v3225, %v3228
    %vm3246 = vcmask 7168
    %3247 = vst.msk [vmem:[%s9] sm:$0xff] %vm3246, %v3230
    %3248 = vst.msk [vmem:[%s9 + $0x8] sm:$0xff] %vm3246, %v3231
    %3249 = vst.msk [vmem:[%s9 + $0x10] sm:$0xff] %vm3246, %v3232
    %3250 = vst.msk [vmem:[%s9 + $0x18] sm:$0xff] %vm3246, %v3233
    %3251 = vst.msk [vmem:[%s9 + $0x20] sm:$0xff] %vm3246, %v3234
    %3252 = vst.msk [vmem:[%s9 + $0x28] sm:$0xff] %vm3246, %v3235
    %3253 = vst.msk [vmem:[%s9 + $0x30] sm:$0xff] %vm3246, %v3236
    %3254 = vst.msk [vmem:[%s9 + $0x38] sm:$0xff] %vm3246, %v3237
    %3255 = vst.msk [vmem:[%s9 + $0x40] sm:$0xff] %vm3246, %v3238
    %3256 = vst.msk [vmem:[%s9 + $0x48] sm:$0xff] %vm3246, %v3239
    %3257 = vst.msk [vmem:[%s9 + $0x50] sm:$0xff] %vm3246, %v3240
    %3258 = vst.msk [vmem:[%s9 + $0x58] sm:$0xff] %vm3246, %v3241
    %3259 = vst.msk [vmem:[%s9 + $0x60] sm:$0xff] %vm3246, %v3242
    %3260 = vst.msk [vmem:[%s9 + $0x68] sm:$0xff] %vm3246, %v3243
    %3261 = vst.msk [vmem:[%s9 + $0x70] sm:$0xff] %vm3246, %v3244
    %3262 = vst.msk [vmem:[%s9 + $0x78] sm:$0xff] %vm3246, %v3245
    // Predicated region
    $region58: #{tpu_custom_call.1} parent=1 // pred_check
      _
    $region59: #{tpu_custom_call.1} parent=1 // pred_check_branch
      %3264 = sbr.rel (0) target = $region61
    $region60: #{tpu_custom_call.1} parent=1 // pred_region
      _
    $region61: #{tpu_custom_call.1} parent=1 // pred_fallthru
      _
    // Predicated region
    $region62: #{tpu_custom_call.1} parent=1 // pred_check
      _
    $region63: #{tpu_custom_call.1} parent=1 // pred_check_branch
      %3266 = sbr.rel (0) target = $region65
    $region64: #{tpu_custom_call.1} parent=1 // pred_region
      _
    $region65: #{tpu_custom_call.1} parent=1 // pred_fallthru
      _
    %3267 = vsyncpa [#allocation4], 1
    %3268 = vsyncpa [#allocation6], 1
    %3269 = vsyncpa [#allocation9], 1

</llo_original>
